<compile_context>
chip_gen: v6e
topology: v6e:2x2x1
jax: 0.10.0
libtpu: 0.0.40
codegen_flags: <defaults>
</compile_context>

<pallas_src>
import functools

import jax
import jax.numpy as jnp
from jax.experimental import pallas as pl
from jax.experimental.pallas import tpu as pltpu


def _knn_group_kernel(*refs, nsample, sub_xyz, unroll):
    """Per (batch, query-tile) kernel.

    refs: q_aug (1, TQ, 4), dist_rows (1, 4, Ns), gather_data (1, G, Ns),
          [q^T (1, 3, TQ) if sub_xyz], out slab (1, K, G, TQ).
    """
    if sub_xyz:
        q_ref, dist_ref, data_ref, qt_ref, slab_ref = refs
    else:
        q_ref, dist_ref, data_ref, slab_ref = refs

    f32 = jnp.float32
    q = q_ref[0]                       # (TQ, 4)  = [qx, qy, qz, 1] (centered coords)
    dist = dist_ref[0]                 # (4, Ns)  = [-2sx; -2sy; -2sz; ||s||^2]
    data = data_ref[0]                 # (G, Ns)  = [s^T ; features ; idx byte rows]
    TQ = q.shape[0]
    Ns = dist.shape[1]
    G = data.shape[0]

    # Distance score in one MXU push (resident RHS was prebuilt in the wrapper):
    #   score[j, i] = ||s_i||^2 - 2 q_j . s_i  (= d^2(q_j, s_i) - ||q_j||^2)
    score = jnp.dot(q, dist, preferred_element_type=f32)                 # (TQ, Ns)

    lane_idx = jax.lax.broadcasted_iota(jnp.int32, (TQ, Ns), 1)
    NS_I = jnp.int32(Ns)
    BIG = f32(1e30)                    # >> any centered squared distance
    dn_bt = (((1,), (1,)), ((), ()))   # contract last dims of both operands (A @ B^T)

    if sub_xyz:
        # Zero-padded query transpose: subtracting it from the full (G, TQ) result
        # keeps the per-k store unsliced (rows 3.. are untouched).  Built once per tile.
        qpad = jnp.concatenate([qt_ref[0], jnp.zeros((G - 3, TQ), f32)], axis=0)

    def step(k, running):
        # First-index tie-break argmin over the lane (support) axis.
        mn = jnp.min(running, axis=1, keepdims=True)                     # (TQ, 1)
        cand = jnp.where(running == mn, lane_idx, NS_I)                  # (TQ, Ns)
        amin = jnp.min(cand, axis=1, keepdims=True)                      # (TQ, 1)
        sel = cand == amin                                               # one compare feeds
        # ... both the one-hot gather operand and the running-mask update.
        out_k = jax.lax.dot_general(data, sel.astype(f32), dn_bt,
                                    preferred_element_type=f32)          # (G, TQ)
        if sub_xyz:
            out_k = out_k - qpad
        slab_ref[0, k] = out_k                                           # single unsliced store
        return jnp.where(sel, BIG, running)

    if nsample <= 8:
        running = score
        for k in range(nsample):
            running = step(k, running)
    else:
        jax.lax.fori_loop(0, nsample, step, score, unroll=unroll)


def _round_up(x, m):
    return ((x + m - 1) // m) * m


def _pick_query_tile(nq, ns, K, G, batch, budget_bytes, max_tile=2048):
    """Largest query tile TQ (divisor of Nq, multiple of 128 unless TQ == Nq) whose
    estimated VMEM working set fits the budget; keeps >= 2 grid steps when possible."""
    f32 = 4
    Gp = _round_up(max(G, 1), 8)

    def est(tq):
        planes = 5 * tq * ns * f32            # running/score, lane_idx, cand, sel, one-hot
        resident = 2 * (4 + G) * ns * f32     # dist rows + gather data (2 bufs worst case)
        q_blk = 2 * tq * 128 * f32            # (TQ, 4) lane-padded query block, 2 bufs
        qt_blk = 2 * 8 * tq * f32             # (3, TQ) sublane-padded q^T block, 2 bufs
        out_blk = 2 * K * Gp * tq * f32       # fused output slab, 2 bufs
        return planes + resident + q_blk + qt_blk + out_blk

    cands = [t for t in range(128, min(nq, max_tile) + 1, 128) if nq % t == 0]
    if not cands:
        cands = [nq]
    fitting = [t for t in cands if est(t) <= budget_bytes]
    pool = fitting if fitting else cands[:1]      # guard: smallest tile if nothing fits
    if batch * (nq // min(pool)) >= 2:            # keep both TensorCores busy (v7x)
        pool = [t for t in pool if batch * (nq // t) >= 2] or pool
    best = max(pool)
    return best, est(best)


def knn_group(query_xyz, support_xyz, features=None, *, nsample,
              relative_xyz=True, normalize_dp=False, return_only_idx=False):
    """JAX/Pallas equivalent of KNNGroup.forward.

    query_xyz   : (B, Nq, 3)
    support_xyz : (B, Ns, 3)
    features    : (B, C, Ns) or None
    returns       idx (B, Nq, K) int32 if return_only_idx, else
                  (idx, grouped_xyz (B,3,Nq,K) f32, grouped_features (B,C,Nq,K) f32 or None)
    """
    query_xyz = jnp.asarray(query_xyz, jnp.float32)
    support_xyz = jnp.asarray(support_xyz, jnp.float32)
    B, Nq, _ = query_xyz.shape
    _, Ns, _ = support_xyz.shape
    K = int(nsample)
    if K > Ns:
        raise ValueError(f"nsample={K} must be <= number of support points {Ns}")
    if Ns >= (1 << 24):
        raise ValueError("Ns must be < 2^24 for exact byte-split index extraction")

    include_xyz = not return_only_idx
    has_features = (features is not None) and include_xyz
    if has_features:
        features = jnp.asarray(features, jnp.float32)
        C = features.shape[1]
    else:
        C = 0

    n_idx = 1 if Ns <= 256 else (2 if Ns <= 65536 else 3)
    G = (3 if include_xyz else 0) + C + n_idx
    sub_xyz = include_xyz and relative_xyz

    # --- wrapper-side prep (hoisted out of the kernel, per review) -------------------
    # Center coordinates per batch: translation-invariant, avoids cancellation in the
    # expanded-form distance.  Gather data keeps ORIGINAL coordinates.
    center = jnp.mean(support_xyz, axis=1, keepdims=True)                # (B, 1, 3)
    q_c = query_xyz - center
    s_c_t = jnp.transpose(support_xyz - center, (0, 2, 1))               # (B, 3, Ns)
    ssq = jnp.sum(s_c_t * s_c_t, axis=1, keepdims=True)                  # (B, 1, Ns)
    dist_rows = jnp.concatenate([-2.0 * s_c_t, ssq], axis=1)             # (B, 4, Ns)
    q_aug = jnp.concatenate([q_c, jnp.ones((B, Nq, 1), jnp.float32)], axis=-1)  # (B, Nq, 4)

    # Byte-split lane-index rows: each row value <= 255 so the one-hot gather matmul
    # reproduces it exactly regardless of the MXU's f32 decomposition.
    lane = jnp.arange(Ns, dtype=jnp.int32)
    idx_rows = jnp.stack(
        [((lane >> (8 * r)) & 255).astype(jnp.float32) for r in range(n_idx)], axis=0)
    idx_rows = jnp.broadcast_to(idx_rows[None], (B, n_idx, Ns))

    rows = []
    if include_xyz:
        rows.append(jnp.transpose(support_xyz, (0, 2, 1)))               # (B, 3, Ns)
    if has_features:
        rows.append(features)                                            # (B, C, Ns)
    rows.append(idx_rows)
    gather_data = jnp.concatenate(rows, axis=1)                          # (B, G, Ns)

    qt = jnp.transpose(query_xyz, (0, 2, 1)) if sub_xyz else None        # (B, 3, Nq)

    # --- tile sizing ------------------------------------------------------------------
    try:
        vmem_cap = int(pltpu.get_tpu_info().vmem_capacity_bytes)
    except Exception:
        vmem_cap = 64 * 1024 * 1024    # conservative default (v7x per-TC)
    TQ, est_bytes = _pick_query_tile(Nq, Ns, K, G, B, int(vmem_cap * 0.7))
    n_qtiles = Nq // TQ
    vmem_limit = int(min(vmem_cap * 0.98, max(32 << 20, est_bytes * 1.25)))

    unroll = 1
    for u in (8, 4, 2):
        if K % u == 0:
            unroll = u
            break

    kernel = functools.partial(_knn_group_kernel, nsample=K,
                               sub_xyz=sub_xyz, unroll=unroll)

    def run(single_buffer):
        resident_kw = {}
        if single_buffer and hasattr(pl, "Buffered"):
            # Grid-constant inputs never change -> single buffer halves their footprint.
            resident_kw = dict(pipeline_mode=pl.Buffered(1))
        in_specs = [
            pl.BlockSpec((1, TQ, 4), lambda b, t: (b, t, 0)),            # augmented query
            pl.BlockSpec((1, 4, Ns), lambda b, t: (b, 0, 0), **resident_kw),
            pl.BlockSpec((1, G, Ns), lambda b, t: (b, 0, 0), **resident_kw),
        ]
        inputs = [q_aug, dist_rows, gather_data]
        if sub_xyz:
            in_specs.append(pl.BlockSpec((1, 3, TQ), lambda b, t: (b, 0, t)))
            inputs.append(qt)
        grid_spec = pltpu.PrefetchScalarGridSpec(
            num_scalar_prefetch=0,
            grid=(B, n_qtiles),
            in_specs=in_specs,
            out_specs=pl.BlockSpec((1, K, G, TQ), lambda b, t: (b, 0, 0, t)),
        )
        return pl.pallas_call(
            kernel,
            out_shape=jax.ShapeDtypeStruct((B, K, G, Nq), jnp.float32),
            grid_spec=grid_spec,
            compiler_params=pltpu.CompilerParams(
                dimension_semantics=("parallel", "parallel"),
                vmem_limit_bytes=vmem_limit),
        )(*inputs)

    try:
        slab = run(True)
    except Exception:
        slab = run(False)   # fallback if Buffered(1) is unsupported on this JAX/Mosaic

    # --- glue: split the lane-dense (B, K, G, Nq) slab into PyTorch-layout outputs ----
    off = 0
    gxyz = None
    if include_xyz:
        gxyz = jnp.transpose(slab[:, :, 0:3, :], (0, 2, 3, 1))           # (B, 3, Nq, K)
        off = 3
    gfeat = (jnp.transpose(slab[:, :, off:off + C, :], (0, 2, 3, 1))     # (B, C, Nq, K)
             if has_features else None)

    idx = jnp.zeros((B, K, Nq), jnp.int32)
    for r in range(n_idx):
        idx = idx + (slab[:, :, G - n_idx + r, :].astype(jnp.int32) << (8 * r))
    idx = jnp.transpose(idx, (0, 2, 1))                                  # (B, Nq, K)

    if return_only_idx:
        return idx

    if normalize_dp:
        # Matches torch: per-batch global max over (Nq, K) of the point-wise norm.
        norm = jnp.sqrt(jnp.sum(gxyz ** 2, axis=1))                      # (B, Nq, K)
        gxyz = gxyz / jnp.amax(norm, axis=(1, 2))[:, None, None, None]
    return idx, gxyz, gfeat


def _reference(query, support, features, K, relative_xyz=True):
    """Pure-JAX reference with identical (first-index tie-break) selection semantics."""
    B, Nq, _ = query.shape
    _, Ns, _ = support.shape
    d2 = jnp.sum((query[:, :, None, :] - support[:, None, :, :]) ** 2, axis=-1)  # (B,Nq,Ns)
    dd = d2
    cols = []
    for _ in range(K):
        a = jnp.argmin(dd, axis=-1)                                # (B, Nq)
        cols.append(a)
        oh = jax.nn.one_hot(a, Ns, dtype=jnp.bool_)                # (B, Nq, Ns)
        dd = jnp.where(oh, jnp.inf, dd)
    idx = jnp.stack(cols, axis=-1).astype(jnp.int32)               # (B, Nq, K)

    def one_batch(sup, fea, ii, qq):
        gx = sup[ii]                                               # (Nq, K, 3)
        if relative_xyz:
            gx = gx - qq[:, None, :]
        gf = fea[:, ii]                                            # (C, Nq, K)
        return gx, gf

    gx, gf = jax.vmap(one_batch)(support, features, idx, query)
    grouped_xyz = jnp.transpose(gx, (0, 3, 1, 2))                  # (B, 3, Nq, K)
    return idx, grouped_xyz, gf


if __name__ == "__main__":
    B, Nq, Ns, C, K = 2, 8, 16, 4, 4
    key = jax.random.PRNGKey(0)
    kq, ks, kf = jax.random.split(key, 3)
    query_xyz = jax.random.normal(kq, (B, Nq, 3), jnp.float32)
    support_xyz = jax.random.normal(ks, (B, Ns, 3), jnp.float32)
    features = jax.random.normal(kf, (B, C, Ns), jnp.float32)

    idx, gxyz, gfeat = knn_group(query_xyz, support_xyz, features, nsample=K)
    jax.block_until_ready((idx, gxyz, gfeat))

    ridx, rgxyz, rgfeat = _reference(query_xyz, support_xyz, features, K)

    assert idx.shape == (B, Nq, K) and idx.dtype == jnp.int32
    assert gxyz.shape == (B, 3, Nq, K)
    assert gfeat.shape == (B, C, Nq, K)
    assert bool(jnp.all(idx == ridx)), "idx mismatch vs reference"
    assert bool(jnp.allclose(gxyz, rgxyz, atol=1e-5, rtol=1e-5)), "grouped_xyz mismatch"
    assert bool(jnp.allclose(gfeat, rgfeat, atol=1e-5, rtol=1e-5)), "grouped_features mismatch"

    # features=None variant (G = 3 + idx rows).
    idx2, gxyz2, gfeat2 = knn_group(query_xyz, support_xyz, None, nsample=K)
    jax.block_until_ready((idx2, gxyz2))
    assert gfeat2 is None
    assert bool(jnp.all(idx2 == ridx)), "idx mismatch (features=None)"
    assert bool(jnp.allclose(gxyz2, rgxyz, atol=1e-5, rtol=1e-5)), "grouped_xyz mismatch (features=None)"

    # normalize_dp glue.
    _, gxyz_n, _ = knn_group(query_xyz, support_xyz, features, nsample=K, normalize_dp=True)
    jax.block_until_ready(gxyz_n)
    rnorm = jnp.sqrt(jnp.sum(rgxyz ** 2, axis=1))
    rgxyz_n = rgxyz / jnp.amax(rnorm, axis=(1, 2))[:, None, None, None]
    assert bool(jnp.allclose(gxyz_n, rgxyz_n, atol=1e-5, rtol=1e-5)), "normalize_dp mismatch"

    # idx-only kernel variant (gather matrix carries only the index byte rows).
    idx_only = knn_group(query_xyz, support_xyz, None, nsample=K, return_only_idx=True)
    jax.block_until_ready(idx_only)
    assert bool(jnp.all(idx_only == ridx)), "idx-only mismatch vs reference"

    print("KERNEL_OK")
</pallas_src>

<mosaic_0001>
module attributes {stable_mosaic.version = 11 : i64} {
  func.func @_knn_group_kernel(%arg0: i32, %arg1: i32, %arg2: memref<1x8x4xf32, #tpu.memory_space<vmem>>, %arg3: memref<1x4x16xf32, #tpu.memory_space<vmem>>, %arg4: memref<1x8x16xf32, #tpu.memory_space<vmem>>, %arg5: memref<1x3x8xf32, #tpu.memory_space<vmem>>, %arg6: memref<1x4x8x8xf32, #tpu.memory_space<vmem>>) attributes {dimension_semantics = [#tpu.dimension_semantics<parallel>, #tpu.dimension_semantics<parallel>], iteration_bounds = array<i64: 2, 1>, scalar_prefetch = 0 : i64, scratch_operands = 0 : i64, tpu.core_type = #tpu.core_type<tc>, window_params = [{transform_indices = @transform_0, window_bounds = array<i64: 1, 8, 4>}, {pipeline_mode = #tpu.pipeline_mode<synchronous>, transform_indices = @transform_1, window_bounds = array<i64: 1, 4, 16>}, {pipeline_mode = #tpu.pipeline_mode<synchronous>, transform_indices = @transform_2, window_bounds = array<i64: 1, 8, 16>}, {transform_indices = @transform_3, window_bounds = array<i64: 1, 3, 8>}, {transform_indices = @transform_4, window_bounds = array<i64: 1, 4, 8, 8>}]} {
    %c0 = arith.constant 0 : index
    %c0_0 = arith.constant 0 : index
    %c0_1 = arith.constant 0 : index
    %0 = vector.load %arg2[%c0, %c0_0, %c0_1] : memref<1x8x4xf32, #tpu.memory_space<vmem>>, vector<1x8x4xf32>
    %1 = vector.shape_cast %0 : vector<1x8x4xf32> to vector<8x4xf32>
    %c0_2 = arith.constant 0 : index
    %c0_3 = arith.constant 0 : index
    %c0_4 = arith.constant 0 : index
    %2 = vector.load %arg3[%c0_2, %c0_3, %c0_4] : memref<1x4x16xf32, #tpu.memory_space<vmem>>, vector<1x4x16xf32>
    %3 = vector.shape_cast %2 : vector<1x4x16xf32> to vector<4x16xf32>
    %c0_5 = arith.constant 0 : index
    %c0_6 = arith.constant 0 : index
    %c0_7 = arith.constant 0 : index
    %4 = vector.load %arg4[%c0_5, %c0_6, %c0_7] : memref<1x8x16xf32, #tpu.memory_space<vmem>>, vector<1x8x16xf32>
    %5 = vector.shape_cast %4 : vector<1x8x16xf32> to vector<8x16xf32>
    %cst = arith.constant dense<0.000000e+00> : vector<8x16xf32>
    %6 = tpu.matmul %1, %3, %cst {dimension_numbers = #tpu.dot_dimension_numbers<[1], [0], [0], [1], [0, 0, 1, 1], [], []>} : vector<8x4xf32>, vector<4x16xf32>, vector<8x16xf32> -> vector<8x16xf32>
    %7 = tpu.iota {dimensions = array<i32: 1>} : vector<8x16xi32>
    %c0_8 = arith.constant 0 : index
    %c0_9 = arith.constant 0 : index
    %c0_10 = arith.constant 0 : index
    %8 = vector.load %arg5[%c0_8, %c0_9, %c0_10] : memref<1x3x8xf32, #tpu.memory_space<vmem>>, vector<1x3x8xf32>
    %9 = vector.shape_cast %8 : vector<1x3x8xf32> to vector<3x8xf32>
    %cst_11 = arith.constant 0.000000e+00 : f32
    %10 = vector.broadcast %cst_11 : f32 to vector<5x8xf32>
    %11 = tpu.concatenate %9, %10 in 0 : vector<3x8xf32>, vector<5x8xf32> -> vector<8x8xf32>
    %cst_12 = arith.constant dense<0x7F800000> : vector<8xf32>
    %12 = vector.multi_reduction <minimumf>, %6, %cst_12 [1] : vector<8x16xf32> to vector<8xf32>
    %13 = vector.shape_cast %12 : vector<8xf32> to vector<8x1xf32>
    %14 = vector.broadcast %13 : vector<8x1xf32> to vector<8x16xf32>
    %15 = arith.cmpf oeq, %6, %14 : vector<8x16xf32>
    %c16_i32 = arith.constant 16 : i32
    %16 = vector.broadcast %c16_i32 : i32 to vector<8x16xi32>
    %17 = arith.select %15, %7, %16 : vector<8x16xi1>, vector<8x16xi32>
    %cst_13 = arith.constant dense<2147483647> : vector<8xi32>
    %18 = vector.multi_reduction <minsi>, %17, %cst_13 [1] : vector<8x16xi32> to vector<8xi32>
    %19 = vector.shape_cast %18 : vector<8xi32> to vector<8x1xi32>
    %20 = vector.broadcast %19 : vector<8x1xi32> to vector<8x16xi32>
    %21 = arith.cmpi eq, %17, %20 : vector<8x16xi32>
    %22 = arith.extui %21 : vector<8x16xi1> to vector<8x16xi32>
    %23 = arith.sitofp %22 : vector<8x16xi32> to vector<8x16xf32>
    %cst_14 = arith.constant dense<0.000000e+00> : vector<8x8xf32>
    %24 = tpu.matmul %5, %23, %cst_14 {dimension_numbers = #tpu.dot_dimension_numbers<[1], [1], [0], [0], [0, 0, 1, 0], [], []>} : vector<8x16xf32>, vector<8x16xf32>, vector<8x8xf32> -> vector<8x8xf32>
    %25 = arith.subf %24, %11 : vector<8x8xf32>
    %c0_15 = arith.constant 0 : index
    %c0_16 = arith.constant 0 : index
    %c0_17 = arith.constant 0 : index
    %c0_18 = arith.constant 0 : index
    %26 = vector.load %arg6[%c0_15, %c0_16, %c0_17, %c0_18] : memref<1x4x8x8xf32, #tpu.memory_space<vmem>>, vector<1x1x8x8xf32>
    %27 = vector.shape_cast %26 : vector<1x1x8x8xf32> to vector<8x8xf32>
    %28 = vector.shape_cast %25 : vector<8x8xf32> to vector<1x1x8x8xf32>
    tpu.vector_store %arg6[%c0_15, %c0_16, %c0_17, %c0_18], %28 {strides = array<i32>} : memref<1x4x8x8xf32, #tpu.memory_space<vmem>>, vector<1x1x8x8xf32>,
    %cst_19 = arith.constant 1.000000e+30 : f32
    %29 = vector.broadcast %cst_19 : f32 to vector<8x16xf32>
    %30 = arith.select %21, %29, %6 : vector<8x16xi1>, vector<8x16xf32>
    %cst_20 = arith.constant dense<0x7F800000> : vector<8xf32>
    %31 = vector.multi_reduction <minimumf>, %30, %cst_20 [1] : vector<8x16xf32> to vector<8xf32>
    %32 = vector.shape_cast %31 : vector<8xf32> to vector<8x1xf32>
    %33 = vector.broadcast %32 : vector<8x1xf32> to vector<8x16xf32>
    %34 = arith.cmpf oeq, %30, %33 : vector<8x16xf32>
    %c16_i32_21 = arith.constant 16 : i32
    %35 = vector.broadcast %c16_i32_21 : i32 to vector<8x16xi32>
    %36 = arith.select %34, %7, %35 : vector<8x16xi1>, vector<8x16xi32>
    %cst_22 = arith.constant dense<2147483647> : vector<8xi32>
    %37 = vector.multi_reduction <minsi>, %36, %cst_22 [1] : vector<8x16xi32> to vector<8xi32>
    %38 = vector.shape_cast %37 : vector<8xi32> to vector<8x1xi32>
    %39 = vector.broadcast %38 : vector<8x1xi32> to vector<8x16xi32>
    %40 = arith.cmpi eq, %36, %39 : vector<8x16xi32>
    %41 = arith.extui %40 : vector<8x16xi1> to vector<8x16xi32>
    %42 = arith.sitofp %41 : vector<8x16xi32> to vector<8x16xf32>
    %cst_23 = arith.constant dense<0.000000e+00> : vector<8x8xf32>
    %43 = tpu.matmul %5, %42, %cst_23 {dimension_numbers = #tpu.dot_dimension_numbers<[1], [1], [0], [0], [0, 0, 1, 0], [], []>} : vector<8x16xf32>, vector<8x16xf32>, vector<8x8xf32> -> vector<8x8xf32>
    %44 = arith.subf %43, %11 : vector<8x8xf32>
    %c0_24 = arith.constant 0 : index
    %c1 = arith.constant 1 : index
    %c0_25 = arith.constant 0 : index
    %c0_26 = arith.constant 0 : index
    %45 = vector.load %arg6[%c0_24, %c1, %c0_25, %c0_26] : memref<1x4x8x8xf32, #tpu.memory_space<vmem>>, vector<1x1x8x8xf32>
    %46 = vector.shape_cast %45 : vector<1x1x8x8xf32> to vector<8x8xf32>
    %47 = vector.shape_cast %44 : vector<8x8xf32> to vector<1x1x8x8xf32>
    tpu.vector_store %arg6[%c0_24, %c1, %c0_25, %c0_26], %47 {strides = array<i32>} : memref<1x4x8x8xf32, #tpu.memory_space<vmem>>, vector<1x1x8x8xf32>,
    %cst_27 = arith.constant 1.000000e+30 : f32
    %48 = vector.broadcast %cst_27 : f32 to vector<8x16xf32>
    %49 = arith.select %40, %48, %30 : vector<8x16xi1>, vector<8x16xf32>
    %cst_28 = arith.constant dense<0x7F800000> : vector<8xf32>
    %50 = vector.multi_reduction <minimumf>, %49, %cst_28 [1] : vector<8x16xf32> to vector<8xf32>
    %51 = vector.shape_cast %50 : vector<8xf32> to vector<8x1xf32>
    %52 = vector.broadcast %51 : vector<8x1xf32> to vector<8x16xf32>
    %53 = arith.cmpf oeq, %49, %52 : vector<8x16xf32>
    %c16_i32_29 = arith.constant 16 : i32
    %54 = vector.broadcast %c16_i32_29 : i32 to vector<8x16xi32>
    %55 = arith.select %53, %7, %54 : vector<8x16xi1>, vector<8x16xi32>
    %cst_30 = arith.constant dense<2147483647> : vector<8xi32>
    %56 = vector.multi_reduction <minsi>, %55, %cst_30 [1] : vector<8x16xi32> to vector<8xi32>
    %57 = vector.shape_cast %56 : vector<8xi32> to vector<8x1xi32>
    %58 = vector.broadcast %57 : vector<8x1xi32> to vector<8x16xi32>
    %59 = arith.cmpi eq, %55, %58 : vector<8x16xi32>
    %60 = arith.extui %59 : vector<8x16xi1> to vector<8x16xi32>
    %61 = arith.sitofp %60 : vector<8x16xi32> to vector<8x16xf32>
    %cst_31 = arith.constant dense<0.000000e+00> : vector<8x8xf32>
    %62 = tpu.matmul %5, %61, %cst_31 {dimension_numbers = #tpu.dot_dimension_numbers<[1], [1], [0], [0], [0, 0, 1, 0], [], []>} : vector<8x16xf32>, vector<8x16xf32>, vector<8x8xf32> -> vector<8x8xf32>
    %63 = arith.subf %62, %11 : vector<8x8xf32>
    %c0_32 = arith.constant 0 : index
    %c2 = arith.constant 2 : index
    %c0_33 = arith.constant 0 : index
    %c0_34 = arith.constant 0 : index
    %64 = vector.load %arg6[%c0_32, %c2, %c0_33, %c0_34] : memref<1x4x8x8xf32, #tpu.memory_space<vmem>>, vector<1x1x8x8xf32>
    %65 = vector.shape_cast %64 : vector<1x1x8x8xf32> to vector<8x8xf32>
    %66 = vector.shape_cast %63 : vector<8x8xf32> to vector<1x1x8x8xf32>
    tpu.vector_store %arg6[%c0_32, %c2, %c0_33, %c0_34], %66 {strides = array<i32>} : memref<1x4x8x8xf32, #tpu.memory_space<vmem>>, vector<1x1x8x8xf32>,
    %cst_35 = arith.constant 1.000000e+30 : f32
    %67 = vector.broadcast %cst_35 : f32 to vector<8x16xf32>
    %68 = arith.select %59, %67, %49 : vector<8x16xi1>, vector<8x16xf32>
    %cst_36 = arith.constant dense<0x7F800000> : vector<8xf32>
    %69 = vector.multi_reduction <minimumf>, %68, %cst_36 [1] : vector<8x16xf32> to vector<8xf32>
    %70 = vector.shape_cast %69 : vector<8xf32> to vector<8x1xf32>
    %71 = vector.broadcast %70 : vector<8x1xf32> to vector<8x16xf32>
    %72 = arith.cmpf oeq, %68, %71 : vector<8x16xf32>
    %c16_i32_37 = arith.constant 16 : i32
    %73 = vector.broadcast %c16_i32_37 : i32 to vector<8x16xi32>
    %74 = arith.select %72, %7, %73 : vector<8x16xi1>, vector<8x16xi32>
    %cst_38 = arith.constant dense<2147483647> : vector<8xi32>
    %75 = vector.multi_reduction <minsi>, %74, %cst_38 [1] : vector<8x16xi32> to vector<8xi32>
    %76 = vector.shape_cast %75 : vector<8xi32> to vector<8x1xi32>
    %77 = vector.broadcast %76 : vector<8x1xi32> to vector<8x16xi32>
    %78 = arith.cmpi eq, %74, %77 : vector<8x16xi32>
    %79 = arith.extui %78 : vector<8x16xi1> to vector<8x16xi32>
    %80 = arith.sitofp %79 : vector<8x16xi32> to vector<8x16xf32>
    %cst_39 = arith.constant dense<0.000000e+00> : vector<8x8xf32>
    %81 = tpu.matmul %5, %80, %cst_39 {dimension_numbers = #tpu.dot_dimension_numbers<[1], [1], [0], [0], [0, 0, 1, 0], [], []>} : vector<8x16xf32>, vector<8x16xf32>, vector<8x8xf32> -> vector<8x8xf32>
    %82 = arith.subf %81, %11 : vector<8x8xf32>
    %c0_40 = arith.constant 0 : index
    %c3 = arith.constant 3 : index
    %c0_41 = arith.constant 0 : index
    %c0_42 = arith.constant 0 : index
    %83 = vector.load %arg6[%c0_40, %c3, %c0_41, %c0_42] : memref<1x4x8x8xf32, #tpu.memory_space<vmem>>, vector<1x1x8x8xf32>
    %84 = vector.shape_cast %83 : vector<1x1x8x8xf32> to vector<8x8xf32>
    %85 = vector.shape_cast %82 : vector<8x8xf32> to vector<1x1x8x8xf32>
    tpu.vector_store %arg6[%c0_40, %c3, %c0_41, %c0_42], %85 {strides = array<i32>} : memref<1x4x8x8xf32, #tpu.memory_space<vmem>>, vector<1x1x8x8xf32>,
    return
  }
  func.func @transform_0(%arg0: i32, %arg1: i32) -> (i32, i32, i32) {
    %c0_i32 = arith.constant 0 : i32
    %c0_i32_0 = arith.constant 0 : i32
    return %arg0, %arg1, %c0_i32 : i32, i32, i32
  }
  func.func @transform_1(%arg0: i32, %arg1: i32) -> (i32, i32, i32) {
    %c0_i32 = arith.constant 0 : i32
    %c0_i32_0 = arith.constant 0 : i32
    %c0_i32_1 = arith.constant 0 : i32
    return %arg0, %c0_i32, %c0_i32_0 : i32, i32, i32
  }
  func.func @transform_2(%arg0: i32, %arg1: i32) -> (i32, i32, i32) {
    %c0_i32 = arith.constant 0 : i32
    %c0_i32_0 = arith.constant 0 : i32
    %c0_i32_1 = arith.constant 0 : i32
    return %arg0, %c0_i32, %c0_i32_0 : i32, i32, i32
  }
  func.func @transform_3(%arg0: i32, %arg1: i32) -> (i32, i32, i32) {
    %c0_i32 = arith.constant 0 : i32
    %c0_i32_0 = arith.constant 0 : i32
    return %arg0, %c0_i32, %arg1 : i32, i32, i32
  }
  func.func @transform_4(%arg0: i32, %arg1: i32) -> (i32, i32, i32, i32) {
    %c0_i32 = arith.constant 0 : i32
    %c0_i32_0 = arith.constant 0 : i32
    %c0_i32_1 = arith.constant 0 : i32
    return %arg0, %c0_i32, %c0_i32_0, %arg1 : i32, i32, i32, i32
  }
}

module attributes {stable_mosaic.version = 11 : i64} {
  func.func @_knn_group_kernel(%arg0: i32, %arg1: i32, %arg2: memref<1x8x4xf32, #tpu.memory_space<vmem>>, %arg3: memref<1x4x16xf32, #tpu.memory_space<vmem>>, %arg4: memref<1x8x16xf32, #tpu.memory_space<vmem>>, %arg5: memref<1x3x8xf32, #tpu.memory_space<vmem>>, %arg6: memref<1x4x8x8xf32, #tpu.memory_space<vmem>>) attributes {dimension_semantics = [#tpu.dimension_semantics<parallel>, #tpu.dimension_semantics<parallel>], iteration_bounds = array<i64: 2, 1>, scalar_prefetch = 0 : i64, scratch_operands = 0 : i64, tpu.core_type = #tpu.core_type<tc>, window_params = [{transform_indices = @transform_0, window_bounds = array<i64: 1, 8, 4>}, {transform_indices = @transform_1, window_bounds = array<i64: 1, 4, 16>}, {transform_indices = @transform_2, window_bounds = array<i64: 1, 8, 16>}, {transform_indices = @transform_3, window_bounds = array<i64: 1, 3, 8>}, {transform_indices = @transform_4, window_bounds = array<i64: 1, 4, 8, 8>}]} {
    %c0 = arith.constant 0 : index
    %c0_0 = arith.constant 0 : index
    %c0_1 = arith.constant 0 : index
    %0 = vector.load %arg2[%c0, %c0_0, %c0_1] : memref<1x8x4xf32, #tpu.memory_space<vmem>>, vector<1x8x4xf32>
    %1 = vector.shape_cast %0 : vector<1x8x4xf32> to vector<8x4xf32>
    %c0_2 = arith.constant 0 : index
    %c0_3 = arith.constant 0 : index
    %c0_4 = arith.constant 0 : index
    %2 = vector.load %arg3[%c0_2, %c0_3, %c0_4] : memref<1x4x16xf32, #tpu.memory_space<vmem>>, vector<1x4x16xf32>
    %3 = vector.shape_cast %2 : vector<1x4x16xf32> to vector<4x16xf32>
    %c0_5 = arith.constant 0 : index
    %c0_6 = arith.constant 0 : index
    %c0_7 = arith.constant 0 : index
    %4 = vector.load %arg4[%c0_5, %c0_6, %c0_7] : memref<1x8x16xf32, #tpu.memory_space<vmem>>, vector<1x8x16xf32>
    %5 = vector.shape_cast %4 : vector<1x8x16xf32> to vector<8x16xf32>
    %cst = arith.constant dense<0.000000e+00> : vector<8x16xf32>
    %6 = tpu.matmul %1, %3, %cst {dimension_numbers = #tpu.dot_dimension_numbers<[1], [0], [0], [1], [0, 0, 1, 1], [], []>} : vector<8x4xf32>, vector<4x16xf32>, vector<8x16xf32> -> vector<8x16xf32>
    %7 = tpu.iota {dimensions = array<i32: 1>} : vector<8x16xi32>
    %c0_8 = arith.constant 0 : index
    %c0_9 = arith.constant 0 : index
    %c0_10 = arith.constant 0 : index
    %8 = vector.load %arg5[%c0_8, %c0_9, %c0_10] : memref<1x3x8xf32, #tpu.memory_space<vmem>>, vector<1x3x8xf32>
    %9 = vector.shape_cast %8 : vector<1x3x8xf32> to vector<3x8xf32>
    %cst_11 = arith.constant 0.000000e+00 : f32
    %10 = vector.broadcast %cst_11 : f32 to vector<5x8xf32>
    %11 = tpu.concatenate %9, %10 in 0 : vector<3x8xf32>, vector<5x8xf32> -> vector<8x8xf32>
    %cst_12 = arith.constant dense<0x7F800000> : vector<8xf32>
    %12 = vector.multi_reduction <minimumf>, %6, %cst_12 [1] : vector<8x16xf32> to vector<8xf32>
    %13 = vector.shape_cast %12 : vector<8xf32> to vector<8x1xf32>
    %14 = vector.broadcast %13 : vector<8x1xf32> to vector<8x16xf32>
    %15 = arith.cmpf oeq, %6, %14 : vector<8x16xf32>
    %c16_i32 = arith.constant 16 : i32
    %16 = vector.broadcast %c16_i32 : i32 to vector<8x16xi32>
    %17 = arith.select %15, %7, %16 : vector<8x16xi1>, vector<8x16xi32>
    %cst_13 = arith.constant dense<2147483647> : vector<8xi32>
    %18 = vector.multi_reduction <minsi>, %17, %cst_13 [1] : vector<8x16xi32> to vector<8xi32>
    %19 = vector.shape_cast %18 : vector<8xi32> to vector<8x1xi32>
    %20 = vector.broadcast %19 : vector<8x1xi32> to vector<8x16xi32>
    %21 = arith.cmpi eq, %17, %20 : vector<8x16xi32>
    %22 = arith.extui %21 : vector<8x16xi1> to vector<8x16xi32>
    %23 = arith.sitofp %22 : vector<8x16xi32> to vector<8x16xf32>
    %cst_14 = arith.constant dense<0.000000e+00> : vector<8x8xf32>
    %24 = tpu.matmul %5, %23, %cst_14 {dimension_numbers = #tpu.dot_dimension_numbers<[1], [1], [0], [0], [0, 0, 1, 0], [], []>} : vector<8x16xf32>, vector<8x16xf32>, vector<8x8xf32> -> vector<8x8xf32>
    %25 = arith.subf %24, %11 : vector<8x8xf32>
    %c0_15 = arith.constant 0 : index
    %c0_16 = arith.constant 0 : index
    %c0_17 = arith.constant 0 : index
    %c0_18 = arith.constant 0 : index
    %26 = vector.load %arg6[%c0_15, %c0_16, %c0_17, %c0_18] : memref<1x4x8x8xf32, #tpu.memory_space<vmem>>, vector<1x1x8x8xf32>
    %27 = vector.shape_cast %26 : vector<1x1x8x8xf32> to vector<8x8xf32>
    %28 = vector.shape_cast %25 : vector<8x8xf32> to vector<1x1x8x8xf32>
    tpu.vector_store %arg6[%c0_15, %c0_16, %c0_17, %c0_18], %28 {strides = array<i32>} : memref<1x4x8x8xf32, #tpu.memory_space<vmem>>, vector<1x1x8x8xf32>,
    %cst_19 = arith.constant 1.000000e+30 : f32
    %29 = vector.broadcast %cst_19 : f32 to vector<8x16xf32>
    %30 = arith.select %21, %29, %6 : vector<8x16xi1>, vector<8x16xf32>
    %cst_20 = arith.constant dense<0x7F800000> : vector<8xf32>
    %31 = vector.multi_reduction <minimumf>, %30, %cst_20 [1] : vector<8x16xf32> to vector<8xf32>
    %32 = vector.shape_cast %31 : vector<8xf32> to vector<8x1xf32>
    %33 = vector.broadcast %32 : vector<8x1xf32> to vector<8x16xf32>
    %34 = arith.cmpf oeq, %30, %33 : vector<8x16xf32>
    %c16_i32_21 = arith.constant 16 : i32
    %35 = vector.broadcast %c16_i32_21 : i32 to vector<8x16xi32>
    %36 = arith.select %34, %7, %35 : vector<8x16xi1>, vector<8x16xi32>
    %cst_22 = arith.constant dense<2147483647> : vector<8xi32>
    %37 = vector.multi_reduction <minsi>, %36, %cst_22 [1] : vector<8x16xi32> to vector<8xi32>
    %38 = vector.shape_cast %37 : vector<8xi32> to vector<8x1xi32>
    %39 = vector.broadcast %38 : vector<8x1xi32> to vector<8x16xi32>
    %40 = arith.cmpi eq, %36, %39 : vector<8x16xi32>
    %41 = arith.extui %40 : vector<8x16xi1> to vector<8x16xi32>
    %42 = arith.sitofp %41 : vector<8x16xi32> to vector<8x16xf32>
    %cst_23 = arith.constant dense<0.000000e+00> : vector<8x8xf32>
    %43 = tpu.matmul %5, %42, %cst_23 {dimension_numbers = #tpu.dot_dimension_numbers<[1], [1], [0], [0], [0, 0, 1, 0], [], []>} : vector<8x16xf32>, vector<8x16xf32>, vector<8x8xf32> -> vector<8x8xf32>
    %44 = arith.subf %43, %11 : vector<8x8xf32>
    %c0_24 = arith.constant 0 : index
    %c1 = arith.constant 1 : index
    %c0_25 = arith.constant 0 : index
    %c0_26 = arith.constant 0 : index
    %45 = vector.load %arg6[%c0_24, %c1, %c0_25, %c0_26] : memref<1x4x8x8xf32, #tpu.memory_space<vmem>>, vector<1x1x8x8xf32>
    %46 = vector.shape_cast %45 : vector<1x1x8x8xf32> to vector<8x8xf32>
    %47 = vector.shape_cast %44 : vector<8x8xf32> to vector<1x1x8x8xf32>
    tpu.vector_store %arg6[%c0_24, %c1, %c0_25, %c0_26], %47 {strides = array<i32>} : memref<1x4x8x8xf32, #tpu.memory_space<vmem>>, vector<1x1x8x8xf32>,
    %cst_27 = arith.constant 1.000000e+30 : f32
    %48 = vector.broadcast %cst_27 : f32 to vector<8x16xf32>
    %49 = arith.select %40, %48, %30 : vector<8x16xi1>, vector<8x16xf32>
    %cst_28 = arith.constant dense<0x7F800000> : vector<8xf32>
    %50 = vector.multi_reduction <minimumf>, %49, %cst_28 [1] : vector<8x16xf32> to vector<8xf32>
    %51 = vector.shape_cast %50 : vector<8xf32> to vector<8x1xf32>
    %52 = vector.broadcast %51 : vector<8x1xf32> to vector<8x16xf32>
    %53 = arith.cmpf oeq, %49, %52 : vector<8x16xf32>
    %c16_i32_29 = arith.constant 16 : i32
    %54 = vector.broadcast %c16_i32_29 : i32 to vector<8x16xi32>
    %55 = arith.select %53, %7, %54 : vector<8x16xi1>, vector<8x16xi32>
    %cst_30 = arith.constant dense<2147483647> : vector<8xi32>
    %56 = vector.multi_reduction <minsi>, %55, %cst_30 [1] : vector<8x16xi32> to vector<8xi32>
    %57 = vector.shape_cast %56 : vector<8xi32> to vector<8x1xi32>
    %58 = vector.broadcast %57 : vector<8x1xi32> to vector<8x16xi32>
    %59 = arith.cmpi eq, %55, %58 : vector<8x16xi32>
    %60 = arith.extui %59 : vector<8x16xi1> to vector<8x16xi32>
    %61 = arith.sitofp %60 : vector<8x16xi32> to vector<8x16xf32>
    %cst_31 = arith.constant dense<0.000000e+00> : vector<8x8xf32>
    %62 = tpu.matmul %5, %61, %cst_31 {dimension_numbers = #tpu.dot_dimension_numbers<[1], [1], [0], [0], [0, 0, 1, 0], [], []>} : vector<8x16xf32>, vector<8x16xf32>, vector<8x8xf32> -> vector<8x8xf32>
    %63 = arith.subf %62, %11 : vector<8x8xf32>
    %c0_32 = arith.constant 0 : index
    %c2 = arith.constant 2 : index
    %c0_33 = arith.constant 0 : index
    %c0_34 = arith.constant 0 : index
    %64 = vector.load %arg6[%c0_32, %c2, %c0_33, %c0_34] : memref<1x4x8x8xf32, #tpu.memory_space<vmem>>, vector<1x1x8x8xf32>
    %65 = vector.shape_cast %64 : vector<1x1x8x8xf32> to vector<8x8xf32>
    %66 = vector.shape_cast %63 : vector<8x8xf32> to vector<1x1x8x8xf32>
    tpu.vector_store %arg6[%c0_32, %c2, %c0_33, %c0_34], %66 {strides = array<i32>} : memref<1x4x8x8xf32, #tpu.memory_space<vmem>>, vector<1x1x8x8xf32>,
    %cst_35 = arith.constant 1.000000e+30 : f32
    %67 = vector.broadcast %cst_35 : f32 to vector<8x16xf32>
    %68 = arith.select %59, %67, %49 : vector<8x16xi1>, vector<8x16xf32>
    %cst_36 = arith.constant dense<0x7F800000> : vector<8xf32>
    %69 = vector.multi_reduction <minimumf>, %68, %cst_36 [1] : vector<8x16xf32> to vector<8xf32>
    %70 = vector.shape_cast %69 : vector<8xf32> to vector<8x1xf32>
    %71 = vector.broadcast %70 : vector<8x1xf32> to vector<8x16xf32>
    %72 = arith.cmpf oeq, %68, %71 : vector<8x16xf32>
    %c16_i32_37 = arith.constant 16 : i32
    %73 = vector.broadcast %c16_i32_37 : i32 to vector<8x16xi32>
    %74 = arith.select %72, %7, %73 : vector<8x16xi1>, vector<8x16xi32>
    %cst_38 = arith.constant dense<2147483647> : vector<8xi32>
    %75 = vector.multi_reduction <minsi>, %74, %cst_38 [1] : vector<8x16xi32> to vector<8xi32>
    %76 = vector.shape_cast %75 : vector<8xi32> to vector<8x1xi32>
    %77 = vector.broadcast %76 : vector<8x1xi32> to vector<8x16xi32>
    %78 = arith.cmpi eq, %74, %77 : vector<8x16xi32>
    %79 = arith.extui %78 : vector<8x16xi1> to vector<8x16xi32>
    %80 = arith.sitofp %79 : vector<8x16xi32> to vector<8x16xf32>
    %cst_39 = arith.constant dense<0.000000e+00> : vector<8x8xf32>
    %81 = tpu.matmul %5, %80, %cst_39 {dimension_numbers = #tpu.dot_dimension_numbers<[1], [1], [0], [0], [0, 0, 1, 0], [], []>} : vector<8x16xf32>, vector<8x16xf32>, vector<8x8xf32> -> vector<8x8xf32>
    %82 = arith.subf %81, %11 : vector<8x8xf32>
    %c0_40 = arith.constant 0 : index
    %c3 = arith.constant 3 : index
    %c0_41 = arith.constant 0 : index
    %c0_42 = arith.constant 0 : index
    %83 = vector.load %arg6[%c0_40, %c3, %c0_41, %c0_42] : memref<1x4x8x8xf32, #tpu.memory_space<vmem>>, vector<1x1x8x8xf32>
    %84 = vector.shape_cast %83 : vector<1x1x8x8xf32> to vector<8x8xf32>
    %85 = vector.shape_cast %82 : vector<8x8xf32> to vector<1x1x8x8xf32>
    tpu.vector_store %arg6[%c0_40, %c3, %c0_41, %c0_42], %85 {strides = array<i32>} : memref<1x4x8x8xf32, #tpu.memory_space<vmem>>, vector<1x1x8x8xf32>,
    return
  }
  func.func @transform_0(%arg0: i32, %arg1: i32) -> (i32, i32, i32) {
    %c0_i32 = arith.constant 0 : i32
    %c0_i32_0 = arith.constant 0 : i32
    return %arg0, %arg1, %c0_i32 : i32, i32, i32
  }
  func.func @transform_1(%arg0: i32, %arg1: i32) -> (i32, i32, i32) {
    %c0_i32 = arith.constant 0 : i32
    %c0_i32_0 = arith.constant 0 : i32
    %c0_i32_1 = arith.constant 0 : i32
    return %arg0, %c0_i32, %c0_i32_0 : i32, i32, i32
  }
  func.func @transform_2(%arg0: i32, %arg1: i32) -> (i32, i32, i32) {
    %c0_i32 = arith.constant 0 : i32
    %c0_i32_0 = arith.constant 0 : i32
    %c0_i32_1 = arith.constant 0 : i32
    return %arg0, %c0_i32, %c0_i32_0 : i32, i32, i32
  }
  func.func @transform_3(%arg0: i32, %arg1: i32) -> (i32, i32, i32) {
    %c0_i32 = arith.constant 0 : i32
    %c0_i32_0 = arith.constant 0 : i32
    return %arg0, %c0_i32, %arg1 : i32, i32, i32
  }
  func.func @transform_4(%arg0: i32, %arg1: i32) -> (i32, i32, i32, i32) {
    %c0_i32 = arith.constant 0 : i32
    %c0_i32_0 = arith.constant 0 : i32
    %c0_i32_1 = arith.constant 0 : i32
    return %arg0, %c0_i32, %c0_i32_0, %arg1 : i32, i32, i32, i32
  }
}

</mosaic_0001>

<llo_original>
// kernel: tpu_custom_call.1
$region0: #{tpu_custom_call.1}
  #allocation0 [shape = 'u32[]', space=smem, size = 0x4, offset = 0x4, fixed_abs, tag = 'smem constant byte address 0x4 - core index']
  #allocation1 [shape = 'u32[144,128]{1,0:T(1,128)}', space=vmem, size = 0x12000, scoped, tag = 'internal scratch']
  %s0 = inlined_call_operand.vmem [shape: f32[2,8,4], index: 0, kind: input, shape index: {}]
  %s1 = inlined_call_operand.vmem [shape: f32[2,4,16], index: 1, kind: input, shape index: {}]
  %s2 = inlined_call_operand.vmem [shape: f32[2,8,16], index: 2, kind: input, shape index: {}]
  %s3 = inlined_call_operand.vmem [shape: f32[2,3,8], index: 3, kind: input, shape index: {}]
  %s4 = inlined_call_operand.hbm [shape: f32[2,4,8,8], index: 4, kind: output, shape index: {}]
  %s5 = sld [smem:[#allocation0]]
  $region49: #{tpu_custom_call.1} parent=0
    _
  %s7 = ssub.s32 1, %s5
  %s8 = scalar_select 0, %s7, %s5
  $region1: #{tpu_custom_call.1} parent=0
    #allocation2 [shape = 'u8[32768]{0}', space=vmem, size = 0x8000, scoped, tag = 'output window, operand 0']
    #allocation3 [shape = 's32[2]{0}', space=sflag, size = 0x8, scoped, tag = 'scoped memory for tpu_custom_call.1']
    %9 = vsyncpa [#allocation3], 0
    %s10 = scalar_lea.sflag [#allocation3], 1
    %11 = vsyncpa %s10, 0
    loop: start=0, step=1, limit=4
    $region2: #{tpu_custom_call.1} parent=1 // loop_pre_header
      _
    $region3: #{tpu_custom_call.1} parent=1 // loop_header
      %s13 = sphi 0, %s17
      %p14 = scmp.ge.s32.totalorder %s13, 4
      %s20 = sphi 0, %s32
      %s21 = sphi 0, %s28
      %s22 = sphi 0, %s20
      %s23 = sphi 0, %s21
      %s24 = sphi 0, %s22
      %s25 = sphi 0, %s23
      %s37 = sphi 0, %s39
      %s40 = sphi 0, %s37
      %s41 = sphi 0, %s40
      %s57 = sphi 0, %s41
      %s63 = sphi 0, %s65
      %s66 = sphi 0, %s63
      %s67 = sphi 0, %s66
      %s83 = sphi 0, %s67
      %s89 = sphi 0, %s91
      %s92 = sphi 0, %s89
      %s93 = sphi 0, %s92
      %s109 = sphi 0, %s93
      %s117 = sphi 0, %s119
      %s120 = sphi 0, %s117
      %s121 = sphi 0, %s120
      %s137 = sphi 0, %s121
      %s145 = sphi 0, %s147
      %s148 = sphi 0, %s145
      %s149 = sphi 0, %s148
      %s165 = sphi 0, %s149
    $region4: #{tpu_custom_call.1} parent=1 // loop_header_branch
      %16 = sbr.rel (%p14) target = $region8
    $region5: #{tpu_custom_call.1} parent=1 // loop_body
      %s18 = ssub.s32 %s13, 1
      %s19 = ssub.s32 %s13, 2
      %s26 = sadd.s32 1, %s21
      %p27 = scmp.ge.s32.totalorder %s26, 1
      %s28 = scalar_select %p27, 0, %s26
      %s29 = sadd.s32 1, %s20
      %s30 = scalar_select %p27, %s29, %s20
      %p31 = scmp.ge.s32.totalorder %s30, 2
      %s32 = scalar_select %p31, 0, %s30
      %s33 = ssub.s32 %s20, %s32
      %s34 = ssub.s32 %s21, %s28
      %s35 = sor.u32 %s33, %s34
      %p36 = scmp.eq.s32.totalorder %s35, 0
      %s38 = sadd.s32 %s37, 1
      %s39 = scalar_select %p36, %s37, %s38
      %p42 = pneg %p36
      %p43 = scmp.eq.s32.totalorder %s13, 1
      %p44 = por %p42, %p43
      %p45 = scmp.ne.s32.totalorder %s37, %s40
      %p46 = scmp.eq.s32.totalorder %s13, 0
      %p47 = por %p45, %p46
      %p48 = scmp.ne.s32.totalorder %s37, %s40
      %p49 = scmp.eq.s32.totalorder %s18, 1
      %p50 = por %p48, %p49
      %p51 = scmp.ne.s32.totalorder %s40, %s41
      %p52 = scmp.eq.s32.totalorder %s18, 0
      %p53 = por %p51, %p52
      %p54 = scmp.ne.s32.totalorder %s40, %s41
      %p55 = scmp.eq.s32.totalorder %s19, 1
      %p56 = por %p54, %p55
      %p58 = scmp.ne.s32.totalorder %s41, %s57
      %p59 = scmp.eq.s32.totalorder %s19, 0
      %p60 = por %p58, %p59
      %s61 = ssub.s32 %s20, %s32
      %p62 = scmp.eq.s32.totalorder %s61, 0
      %s64 = sadd.s32 %s63, 1
      %s65 = scalar_select %p62, %s63, %s64
      %p68 = pneg %p62
      %p69 = scmp.eq.s32.totalorder %s13, 1
      %p70 = por %p68, %p69
      %p71 = scmp.ne.s32.totalorder %s63, %s66
      %p72 = scmp.eq.s32.totalorder %s13, 0
      %p73 = por %p71, %p72
      %p74 = scmp.ne.s32.totalorder %s63, %s66
      %p75 = scmp.eq.s32.totalorder %s18, 1
      %p76 = por %p74, %p75
      %p77 = scmp.ne.s32.totalorder %s66, %s67
      %p78 = scmp.eq.s32.totalorder %s18, 0
      %p79 = por %p77, %p78
      %p80 = scmp.ne.s32.totalorder %s66, %s67
      %p81 = scmp.eq.s32.totalorder %s19, 1
      %p82 = por %p80, %p81
      %p84 = scmp.ne.s32.totalorder %s67, %s83
      %p85 = scmp.eq.s32.totalorder %s19, 0
      %p86 = por %p84, %p85
      %s87 = ssub.s32 %s20, %s32
      %p88 = scmp.eq.s32.totalorder %s87, 0
      %s90 = sadd.s32 %s89, 1
      %s91 = scalar_select %p88, %s89, %s90
      %p94 = pneg %p88
      %p95 = scmp.eq.s32.totalorder %s13, 1
      %p96 = por %p94, %p95
      %p97 = scmp.ne.s32.totalorder %s89, %s92
      %p98 = scmp.eq.s32.totalorder %s13, 0
      %p99 = por %p97, %p98
      %p100 = scmp.ne.s32.totalorder %s89, %s92
      %p101 = scmp.eq.s32.totalorder %s18, 1
      %p102 = por %p100, %p101
      %p103 = scmp.ne.s32.totalorder %s92, %s93
      %p104 = scmp.eq.s32.totalorder %s18, 0
      %p105 = por %p103, %p104
      %p106 = scmp.ne.s32.totalorder %s92, %s93
      %p107 = scmp.eq.s32.totalorder %s19, 1
      %p108 = por %p106, %p107
      %p110 = scmp.ne.s32.totalorder %s93, %s109
      %p111 = scmp.eq.s32.totalorder %s19, 0
      %p112 = por %p110, %p111
      %s113 = ssub.s32 %s20, %s32
      %s114 = ssub.s32 %s21, %s28
      %s115 = sor.u32 %s113, %s114
      %p116 = scmp.eq.s32.totalorder %s115, 0
      %s118 = sadd.s32 %s117, 1
      %s119 = scalar_select %p116, %s117, %s118
      %p122 = pneg %p116
      %p123 = scmp.eq.s32.totalorder %s13, 1
      %p124 = por %p122, %p123
      %p125 = scmp.ne.s32.totalorder %s117, %s120
      %p126 = scmp.eq.s32.totalorder %s13, 0
      %p127 = por %p125, %p126
      %p128 = scmp.ne.s32.totalorder %s117, %s120
      %p129 = scmp.eq.s32.totalorder %s18, 1
      %p130 = por %p128, %p129
      %p131 = scmp.ne.s32.totalorder %s120, %s121
      %p132 = scmp.eq.s32.totalorder %s18, 0
      %p133 = por %p131, %p132
      %p134 = scmp.ne.s32.totalorder %s120, %s121
      %p135 = scmp.eq.s32.totalorder %s19, 1
      %p136 = por %p134, %p135
      %p138 = scmp.ne.s32.totalorder %s121, %s137
      %p139 = scmp.eq.s32.totalorder %s19, 0
      %p140 = por %p138, %p139
      %s141 = ssub.s32 %s20, %s32
      %s142 = ssub.s32 %s21, %s28
      %s143 = sor.u32 %s141, %s142
      %p144 = scmp.eq.s32.totalorder %s143, 0
      %s146 = sadd.s32 %s145, 1
      %s147 = scalar_select %p144, %s145, %s146
      %p150 = pneg %p144
      %p151 = scmp.eq.s32.totalorder %s13, 1
      %p152 = por %p150, %p151
      %p153 = scmp.ne.s32.totalorder %s145, %s148
      %p154 = scmp.eq.s32.totalorder %s13, 0
      %p155 = por %p153, %p154
      %p156 = scmp.ne.s32.totalorder %s145, %s148
      %p157 = scmp.eq.s32.totalorder %s18, 1
      %p158 = por %p156, %p157
      %p159 = scmp.ne.s32.totalorder %s148, %s149
      %p160 = scmp.eq.s32.totalorder %s18, 0
      %p161 = por %p159, %p160
      %p162 = scmp.ne.s32.totalorder %s148, %s149
      %p163 = scmp.eq.s32.totalorder %s19, 1
      %p164 = por %p162, %p163
      %p166 = scmp.ne.s32.totalorder %s149, %s165
      %p167 = scmp.eq.s32.totalorder %s19, 0
      %p168 = por %p166, %p167
      %p169 = scmp.le.s32.totalorder 1, %s13
      %p170 = scmp.lt.s32.totalorder %s13, 3
      %p171 = pnand %p169, %p170
      %p172 = pneg %p171
      // Predicated region
      $region9: #{tpu_custom_call.1} parent=5 // pred_check
        _
      $region10: #{tpu_custom_call.1} parent=5 // pred_check_branch
        %174 = sbr.rel (%p171) target = $region12
      $region11: #{tpu_custom_call.1} parent=5 // pred_region
        %s175 = ssub.s32 %s13, 1
        // Predicated region
        $region13: #{tpu_custom_call.1} parent=11 // pred_check
          %p176 = pneg %p79
        $region14: #{tpu_custom_call.1} parent=11 // pred_check_branch
          %178 = sbr.rel (%p176) target = $region16
        $region15: #{tpu_custom_call.1} parent=11 // pred_region
          %p179 = scmp.lt.s32.totalorder %s22, 1
          %s180 = scalar_select %p179, %s22, 1
          %s181 = smul.addr %s180, 4
          %s182 = scalar_lea.vmem %s1, %s181
        $region16: #{tpu_custom_call.1} parent=11 // pred_fallthru
          _
        // Predicated region
        $region17: #{tpu_custom_call.1} parent=11 // pred_check
          %p183 = pneg %p105
        $region18: #{tpu_custom_call.1} parent=11 // pred_check_branch
          %185 = sbr.rel (%p183) target = $region20
        $region19: #{tpu_custom_call.1} parent=11 // pred_region
          %p186 = scmp.lt.s32.totalorder %s22, 1
          %s187 = scalar_select %p186, %s22, 1
          %s188 = smul.addr %s187, 8
          %s189 = scalar_lea.vmem %s2, %s188
        $region20: #{tpu_custom_call.1} parent=11 // pred_fallthru
          _
      $region12: #{tpu_custom_call.1} parent=5 // pred_fallthru
        _
      %p190 = scmp.lt.s32.totalorder %s13, 2
      // Predicated region
      $region21: #{tpu_custom_call.1} parent=5 // pred_check
        %p191 = pneg %p190
      $region22: #{tpu_custom_call.1} parent=5 // pred_check_branch
        %193 = sbr.rel (%p191) target = $region24
      $region23: #{tpu_custom_call.1} parent=5 // pred_region
        // Predicated region
        $region25: #{tpu_custom_call.1} parent=23 // pred_check
          %p194 = pneg %p47
        $region26: #{tpu_custom_call.1} parent=23 // pred_check_branch
          %196 = sbr.rel (%p194) target = $region28
        $region27: #{tpu_custom_call.1} parent=23 // pred_region
          %p197 = scmp.lt.s32.totalorder %s20, 1
          %s198 = scalar_select %p197, %s20, 1
          %p199 = scmp.lt.s32.totalorder %s21, 0
          %s200 = scalar_select %p199, %s21, 0
          %s201 = sadd.s32 %s200, %s198
          %s202 = smul.addr %s201, 8
          %s203 = scalar_lea.vmem %s0, %s202
        $region28: #{tpu_custom_call.1} parent=23 // pred_fallthru
          _
        // Predicated region
        $region29: #{tpu_custom_call.1} parent=23 // pred_check
          %p204 = pneg %p127
        $region30: #{tpu_custom_call.1} parent=23 // pred_check_branch
          %206 = sbr.rel (%p204) target = $region32
        $region31: #{tpu_custom_call.1} parent=23 // pred_region
          %p207 = scmp.lt.s32.totalorder %s20, 1
          %s208 = scalar_select %p207, %s20, 1
          %p209 = scmp.lt.s32.totalorder %s21, 0
          %s210 = scalar_select %p209, %s21, 0
          %s211 = sadd.s32 %s210, %s208
          %s212 = smul.addr %s211, 4
          %s213 = scalar_lea.vmem %s3, %s212
        $region32: #{tpu_custom_call.1} parent=23 // pred_fallthru
          _
      $region24: #{tpu_custom_call.1} parent=5 // pred_fallthru
        _
      %p214 = scmp.le.s32.totalorder 1, %s13
      %p215 = scmp.lt.s32.totalorder %s13, 3
      %p216 = pnand %p214, %p215
      %p217 = pneg %p216
      // Predicated region
      $region33: #{tpu_custom_call.1} parent=5 // pred_check
        _
      $region34: #{tpu_custom_call.1} parent=5 // pred_check_branch
        %219 = sbr.rel (%p216) target = $region36
      $region35: #{tpu_custom_call.1} parent=5 // pred_region
        %s220 = ssub.s32 %s13, 1
        %p221 = scmp.lt.s32.totalorder %s22, 1
        %s222 = scalar_select %p221, %s22, 1
        %p223 = scmp.lt.s32.totalorder %s23, 0
        %s224 = scalar_select %p223, %s23, 0
        %s225 = sadd.s32 %s224, %s222
        %s226 = smul.addr %s225, 8
        %s227 = scalar_lea.vmem %s0, %s226
        %p228 = pneg %p53
        %p229 = pneg %p50
        %p230 = scmp.lt.s32.totalorder %s22, 1
        %s231 = scalar_select %p230, %s22, 1
        %s232 = smul.addr %s231, 4
        %s233 = scalar_lea.vmem %s1, %s232
        %p234 = pneg %p79
        %p235 = pneg %p76
        %p236 = scmp.lt.s32.totalorder %s22, 1
        %s237 = scalar_select %p236, %s22, 1
        %s238 = smul.addr %s237, 8
        %s239 = scalar_lea.vmem %s2, %s238
        %p240 = pneg %p105
        %p241 = pneg %p102
        %p242 = scmp.lt.s32.totalorder %s22, 1
        %s243 = scalar_select %p242, %s22, 1
        %p244 = scmp.lt.s32.totalorder %s23, 0
        %s245 = scalar_select %p244, %s23, 0
        %s246 = sadd.s32 %s245, %s243
        %s247 = smul.addr %s246, 4
        %s248 = scalar_lea.vmem %s3, %s247
        %p249 = pneg %p133
        %p250 = pneg %p130
        %p251 = pneg %p161
        %p252 = pneg %p158
        %s253 = sand.u32 %s148, 1
        %s254 = scalar_lea.sflag [#allocation3], %s253
        %s255 = sand.u32 %s148, 1
        %s256 = smul.addr %s255, 32
        %s257 = scalar_lea.vmem [#allocation2], %s256
        %p258 = scmp.lt.s32.totalorder %s22, 1
        %s259 = scalar_select %p258, %s22, 1
        %p260 = scmp.lt.s32.totalorder %s23, 0
        %s261 = scalar_select %p260, %s23, 0
        %s262 = sadd.s32 %s261, %s259
        %s263 = smul.addr %s262, 8
        %s264 = scalar_lea.vmem %s0, %s263
        %p265 = scmp.lt.s32.totalorder %s22, 1
        %s266 = scalar_select %p265, %s22, 1
        %s267 = smul.addr %s266, 4
        %s268 = scalar_lea.vmem %s1, %s267
        %p269 = scmp.lt.s32.totalorder %s22, 1
        %s270 = scalar_select %p269, %s22, 1
        %s271 = smul.addr %s270, 8
        %s272 = scalar_lea.vmem %s2, %s271
        %p273 = scmp.lt.s32.totalorder %s22, 1
        %s274 = scalar_select %p273, %s22, 1
        %p275 = scmp.lt.s32.totalorder %s23, 0
        %s276 = scalar_select %p275, %s23, 0
        %s277 = sadd.s32 %s276, %s274
        %s278 = smul.addr %s277, 4
        %s279 = scalar_lea.vmem %s3, %s278
        %v280 = vld [vmem:[%s264] sm:$0xff]
        %v281 = vld [vmem:[%s268] sm:$0xf]
        %v282 = vld [vmem:[%s272] sm:$0xff]
        %vm283 = vcmask 31744
        %v285 = vsel %vm283, %v280, 0
        %vm287 = vcmask 1043456
        %v289 = vsel %vm287, %v281, 0
        %291 = vmatprep.subr.mxu0 0.0
        %292 = vmatpush1.msra.mxu0 0.0
        %293 = vmatprep.subr.mxu0 0.0
        %294 = vmatpush1.msra.mxu0 0.0
        %295 = vmatprep.subr.mxu0 0.0
        %296 = vmatpush1.msra.mxu0 0.0
        %297 = vmatprep.subr.mxu0 0.0
        %298 = vmatpush1.msra.mxu0 0.0
        %299 = vmatprep.subr.mxu0 0.0
        %300 = vmatpush1.msra.mxu0 0.0
        %301 = vmatprep.subr.mxu0 0.0
        %302 = vmatpush1.msra.mxu0 0.0
        %303 = vmatprep.subr.mxu0 0.0
        %304 = vmatpush1.msra.mxu0 0.0
        %305 = vmatprep.subr.mxu0 0.0
        %306 = vmatpush1.msra.mxu0 0.0
        %307 = vmatprep.subr.mxu0 0.0
        %308 = vmatpush1.msra.mxu0 0.0
        %309 = vmatprep.subr.mxu0 0.0
        %310 = vmatpush1.msra.mxu0 0.0
        %311 = vmatprep.subr.mxu0 0.0
        %312 = vmatpush1.msra.mxu0 0.0
        %313 = vmatprep.subr.mxu0 0.0
        %314 = vmatpush1.msra.mxu0 0.0
        %315 = vmatprep.subr.mxu0 0.0
        %316 = vmatpush1.msra.mxu0 0.0
        %317 = vmatprep.subr.mxu0 0.0
        %318 = vmatpush1.msra.mxu0 0.0
        %319 = vmatprep.subr.mxu0 0.0
        %320 = vmatpush1.msra.mxu0 0.0
        %321 = vmatprep.subr.mxu0 0.0
        %322 = vmatpush1.msra.mxu0 %v289
        %323 = vmatprep.subr.mxu0 0.0
        %324 = vmatpush2.msra.mxu0 0.0
        %325 = vmatprep.subr.mxu0 0.0
        %326 = vmatpush2.msra.mxu0 0.0
        %327 = vmatprep.subr.mxu0 0.0
        %328 = vmatpush2.msra.mxu0 0.0
        %329 = vmatprep.subr.mxu0 0.0
        %330 = vmatpush2.msra.mxu0 0.0
        %331 = vmatprep.subr.mxu0 0.0
        %332 = vmatpush2.msra.mxu0 0.0
        %333 = vmatprep.subr.mxu0 0.0
        %334 = vmatpush2.msra.mxu0 0.0
        %335 = vmatprep.subr.mxu0 0.0
        %336 = vmatpush2.msra.mxu0 0.0
        %337 = vmatprep.subr.mxu0 0.0
        %338 = vmatpush2.msra.mxu0 0.0
        %339 = vmatprep.subr.mxu0 0.0
        %340 = vmatpush2.msra.mxu0 0.0
        %341 = vmatprep.subr.mxu0 0.0
        %342 = vmatpush2.msra.mxu0 0.0
        %343 = vmatprep.subr.mxu0 0.0
        %344 = vmatpush2.msra.mxu0 0.0
        %345 = vmatprep.subr.mxu0 0.0
        %346 = vmatpush2.msra.mxu0 0.0
        %347 = vmatprep.subr.mxu0 0.0
        %348 = vmatpush2.msra.mxu0 0.0
        %349 = vmatprep.subr.mxu0 0.0
        %350 = vmatpush2.msra.mxu0 0.0
        %351 = vmatprep.subr.mxu0 0.0
        %352 = vmatpush2.msra.mxu0 0.0
        %353 = vmatprep.subr.mxu0 0.0
        %354 = vmatpush2.msra.mxu0 0.0
        %355 = vmatprep.mubr.f32.mxu0 0.0
        %356 = vmatmul.mubr.f32.gmra.mxu0 %v285
        %v357 = vpop.f32.mrf.mxu0
        %v358 = vadd.f32 0.0, %v357
        %v359 = vpop.f32.mrf.mxu0
        %360 = vdwg.mxu0
        %v361 = vlaneseq
        %v362 = vand.u32 %v361, 127
        %v363 = vld [vmem:[%s279] sm:$0x7]
        %vm364 = vcmask 1042432
        %v365 = vsel %vm364, %v363, 0.0
        %vm366 = vcmask 130048
        %v367 = vsel %vm366, %v358, inf
        %368 = vmin.xlane.f32.xlu0 %v367
        %v369 = vpop.xlane.xlu0 %368
        %vm370 = vcmp.eq.f32.partialorder %v358, %v369
        %v371 = vsel %vm370, %v362, 16
        %v372 = vsel %vm366, %v371, 2147483647
        %v373 = vand.u32 %v372, 65535
        %v374 = vshra.s32 %v372, 16
        %v375 = vcvt.s32.f32 %v373
        %v376 = vcvt.s32.f32 %v374
        %377 = vmin.xlane.f32.xlu0 %v376
        %v378 = vpop.xlane.xlu0 %377
        %vm379 = vcmp.eq.f32.partialorder %v376, %v378
        %v380 = vsel %vm379, %v375, inf
        %381 = vmin.xlane.f32.xlu0 %v380
        %v382 = vpop.xlane.xlu0 %381
        %v383 = vcvt.f32.s32 %v382
        %v384 = vcvt.f32.s32 %v378
        %v385 = vshll.u32 %v384, 16
        %v386 = vadd.s32 %v385, %v383
        %vm387 = vcmp.eq.s32.totalorder %v371, %v386
        %v388 = vsel %vm387, 1, 0
        %v389 = vcvt.s32.f32 %v388
        %v391 = vsel %vm366, %v282, 0
        %v394 = vsel %vm366, %v389, 0
        %396 = vmatprep.subr.mxu0 0.0
        %397 = vmatpush1.xpose.msra.mxu0 0.0
        %398 = vmatprep.subr.mxu0 0.0
        %399 = vmatpush1.xpose.msra.mxu0 0.0
        %400 = vmatprep.subr.mxu0 0.0
        %401 = vmatpush1.xpose.msra.mxu0 0.0
        %402 = vmatprep.subr.mxu0 0.0
        %403 = vmatpush1.xpose.msra.mxu0 0.0
        %404 = vmatprep.subr.mxu0 0.0
        %405 = vmatpush1.xpose.msra.mxu0 0.0
        %406 = vmatprep.subr.mxu0 0.0
        %407 = vmatpush1.xpose.msra.mxu0 0.0
        %408 = vmatprep.subr.mxu0 0.0
        %409 = vmatpush1.xpose.msra.mxu0 0.0
        %410 = vmatprep.subr.mxu0 0.0
        %411 = vmatpush1.xpose.msra.mxu0 0.0
        %412 = vmatprep.subr.mxu0 0.0
        %413 = vmatpush1.xpose.msra.mxu0 0.0
        %414 = vmatprep.subr.mxu0 0.0
        %415 = vmatpush1.xpose.msra.mxu0 0.0
        %416 = vmatprep.subr.mxu0 0.0
        %417 = vmatpush1.xpose.msra.mxu0 0.0
        %418 = vmatprep.subr.mxu0 0.0
        %419 = vmatpush1.xpose.msra.mxu0 0.0
        %420 = vmatprep.subr.mxu0 0.0
        %421 = vmatpush1.xpose.msra.mxu0 0.0
        %422 = vmatprep.subr.mxu0 0.0
        %423 = vmatpush1.xpose.msra.mxu0 0.0
        %424 = vmatprep.subr.mxu0 0.0
        %425 = vmatpush1.xpose.msra.mxu0 0.0
        %426 = vmatprep.subr.mxu0 0.0
        %427 = vmatpush1.xpose.msra.mxu0 %v394
        %428 = vmatprep.subr.mxu0 0.0
        %429 = vmatpush2.xpose.msra.mxu0 0.0
        %430 = vmatprep.subr.mxu0 0.0
        %431 = vmatpush2.xpose.msra.mxu0 0.0
        %432 = vmatprep.subr.mxu0 0.0
        %433 = vmatpush2.xpose.msra.mxu0 0.0
        %434 = vmatprep.subr.mxu0 0.0
        %435 = vmatpush2.xpose.msra.mxu0 0.0
        %436 = vmatprep.subr.mxu0 0.0
        %437 = vmatpush2.xpose.msra.mxu0 0.0
        %438 = vmatprep.subr.mxu0 0.0
        %439 = vmatpush2.xpose.msra.mxu0 0.0
        %440 = vmatprep.subr.mxu0 0.0
        %441 = vmatpush2.xpose.msra.mxu0 0.0
        %442 = vmatprep.subr.mxu0 0.0
        %443 = vmatpush2.xpose.msra.mxu0 0.0
        %444 = vmatprep.subr.mxu0 0.0
        %445 = vmatpush2.xpose.msra.mxu0 0.0
        %446 = vmatprep.subr.mxu0 0.0
        %447 = vmatpush2.xpose.msra.mxu0 0.0
        %448 = vmatprep.subr.mxu0 0.0
        %449 = vmatpush2.xpose.msra.mxu0 0.0
        %450 = vmatprep.subr.mxu0 0.0
        %451 = vmatpush2.xpose.msra.mxu0 0.0
        %452 = vmatprep.subr.mxu0 0.0
        %453 = vmatpush2.xpose.msra.mxu0 0.0
        %454 = vmatprep.subr.mxu0 0.0
        %455 = vmatpush2.xpose.msra.mxu0 0.0
        %456 = vmatprep.subr.mxu0 0.0
        %457 = vmatpush2.xpose.msra.mxu0 0.0
        %458 = vmatprep.subr.mxu0 0.0
        %459 = vmatpush2.xpose.msra.mxu0 0.0
        %460 = vmatprep.mubr.f32.mxu0 0.0
        %461 = vmatmul.mubr.f32.gmra.mxu0 %v391
        %v462 = vpop.f32.mrf.mxu0
        %v463 = vadd.f32 0.0, %v462
        %v464 = vpop.f32.mrf.mxu0
        %465 = vdwg.mxu0
        %v466 = vsub.f32 %v463, %v365
        %vm467 = vcmask 64512
        %468 = vst.msk [vmem:[%s257] sm:$0xff] %vm467, %v466
        %v469 = vsel %vm387, 1e+30, %v358
        %v470 = vsel %vm366, %v469, inf
        %471 = vmin.xlane.f32.xlu0 %v470
        %v472 = vpop.xlane.xlu0 %471
        %vm473 = vcmp.eq.f32.partialorder %v469, %v472
        %v474 = vsel %vm473, %v362, 16
        %v475 = vsel %vm366, %v474, 2147483647
        %v476 = vand.u32 %v475, 65535
        %v477 = vshra.s32 %v475, 16
        %v478 = vcvt.s32.f32 %v476
        %v479 = vcvt.s32.f32 %v477
        %480 = vmin.xlane.f32.xlu0 %v479
        %v481 = vpop.xlane.xlu0 %480
        %vm482 = vcmp.eq.f32.partialorder %v479, %v481
        %v483 = vsel %vm482, %v478, inf
        %484 = vmin.xlane.f32.xlu0 %v483
        %v485 = vpop.xlane.xlu0 %484
        %v486 = vcvt.f32.s32 %v485
        %v487 = vcvt.f32.s32 %v481
        %v488 = vshll.u32 %v487, 16
        %v489 = vadd.s32 %v488, %v486
        %vm490 = vcmp.eq.s32.totalorder %v474, %v489
        %v491 = vsel %vm490, 1, 0
        %v492 = vcvt.s32.f32 %v491
        %v494 = vsel %vm366, %v492, 0
        %496 = vmatprep.subr.mxu0 0.0
        %497 = vmatpush1.xpose.msra.mxu0 0.0
        %498 = vmatprep.subr.mxu0 0.0
        %499 = vmatpush1.xpose.msra.mxu0 0.0
        %500 = vmatprep.subr.mxu0 0.0
        %501 = vmatpush1.xpose.msra.mxu0 0.0
        %502 = vmatprep.subr.mxu0 0.0
        %503 = vmatpush1.xpose.msra.mxu0 0.0
        %504 = vmatprep.subr.mxu0 0.0
        %505 = vmatpush1.xpose.msra.mxu0 0.0
        %506 = vmatprep.subr.mxu0 0.0
        %507 = vmatpush1.xpose.msra.mxu0 0.0
        %508 = vmatprep.subr.mxu0 0.0
        %509 = vmatpush1.xpose.msra.mxu0 0.0
        %510 = vmatprep.subr.mxu0 0.0
        %511 = vmatpush1.xpose.msra.mxu0 0.0
        %512 = vmatprep.subr.mxu0 0.0
        %513 = vmatpush1.xpose.msra.mxu0 0.0
        %514 = vmatprep.subr.mxu0 0.0
        %515 = vmatpush1.xpose.msra.mxu0 0.0
        %516 = vmatprep.subr.mxu0 0.0
        %517 = vmatpush1.xpose.msra.mxu0 0.0
        %518 = vmatprep.subr.mxu0 0.0
        %519 = vmatpush1.xpose.msra.mxu0 0.0
        %520 = vmatprep.subr.mxu0 0.0
        %521 = vmatpush1.xpose.msra.mxu0 0.0
        %522 = vmatprep.subr.mxu0 0.0
        %523 = vmatpush1.xpose.msra.mxu0 0.0
        %524 = vmatprep.subr.mxu0 0.0
        %525 = vmatpush1.xpose.msra.mxu0 0.0
        %526 = vmatprep.subr.mxu0 0.0
        %527 = vmatpush1.xpose.msra.mxu0 %v494
        %528 = vmatprep.subr.mxu0 0.0
        %529 = vmatpush2.xpose.msra.mxu0 0.0
        %530 = vmatprep.subr.mxu0 0.0
        %531 = vmatpush2.xpose.msra.mxu0 0.0
        %532 = vmatprep.subr.mxu0 0.0
        %533 = vmatpush2.xpose.msra.mxu0 0.0
        %534 = vmatprep.subr.mxu0 0.0
        %535 = vmatpush2.xpose.msra.mxu0 0.0
        %536 = vmatprep.subr.mxu0 0.0
        %537 = vmatpush2.xpose.msra.mxu0 0.0
        %538 = vmatprep.subr.mxu0 0.0
        %539 = vmatpush2.xpose.msra.mxu0 0.0
        %540 = vmatprep.subr.mxu0 0.0
        %541 = vmatpush2.xpose.msra.mxu0 0.0
        %542 = vmatprep.subr.mxu0 0.0
        %543 = vmatpush2.xpose.msra.mxu0 0.0
        %544 = vmatprep.subr.mxu0 0.0
        %545 = vmatpush2.xpose.msra.mxu0 0.0
        %546 = vmatprep.subr.mxu0 0.0
        %547 = vmatpush2.xpose.msra.mxu0 0.0
        %548 = vmatprep.subr.mxu0 0.0
        %549 = vmatpush2.xpose.msra.mxu0 0.0
        %550 = vmatprep.subr.mxu0 0.0
        %551 = vmatpush2.xpose.msra.mxu0 0.0
        %552 = vmatprep.subr.mxu0 0.0
        %553 = vmatpush2.xpose.msra.mxu0 0.0
        %554 = vmatprep.subr.mxu0 0.0
        %555 = vmatpush2.xpose.msra.mxu0 0.0
        %556 = vmatprep.subr.mxu0 0.0
        %557 = vmatpush2.xpose.msra.mxu0 0.0
        %558 = vmatprep.subr.mxu0 0.0
        %559 = vmatpush2.xpose.msra.mxu0 0.0
        %560 = vmatprep.mubr.f32.mxu0 0.0
        %561 = vmatmul.mubr.f32.gmra.mxu0 %v391
        %v562 = vpop.f32.mrf.mxu0
        %v563 = vadd.f32 0.0, %v562
        %v564 = vpop.f32.mrf.mxu0
        %565 = vdwg.mxu0
        %v566 = vsub.f32 %v563, %v365
        %s567 = scalar_lea.vmem %s257, 8 [#allocation2]
        %568 = vst.msk [vmem:[%s567] sm:$0xff] %vm467, %v566
        %v569 = vsel %vm490, 1e+30, %v469
        %v570 = vsel %vm366, %v569, inf
        %571 = vmin.xlane.f32.xlu0 %v570
        %v572 = vpop.xlane.xlu0 %571
        %vm573 = vcmp.eq.f32.partialorder %v569, %v572
        %v574 = vsel %vm573, %v362, 16
        %v575 = vsel %vm366, %v574, 2147483647
        %v576 = vand.u32 %v575, 65535
        %v577 = vshra.s32 %v575, 16
        %v578 = vcvt.s32.f32 %v576
        %v579 = vcvt.s32.f32 %v577
        %580 = vmin.xlane.f32.xlu0 %v579
        %v581 = vpop.xlane.xlu0 %580
        %vm582 = vcmp.eq.f32.partialorder %v579, %v581
        %v583 = vsel %vm582, %v578, inf
        %584 = vmin.xlane.f32.xlu0 %v583
        %v585 = vpop.xlane.xlu0 %584
        %v586 = vcvt.f32.s32 %v585
        %v587 = vcvt.f32.s32 %v581
        %v588 = vshll.u32 %v587, 16
        %v589 = vadd.s32 %v588, %v586
        %vm590 = vcmp.eq.s32.totalorder %v574, %v589
        %v591 = vsel %vm590, 1, 0
        %v592 = vcvt.s32.f32 %v591
        %v594 = vsel %vm366, %v592, 0
        %596 = vmatprep.subr.mxu0 0.0
        %597 = vmatpush1.xpose.msra.mxu0 0.0
        %598 = vmatprep.subr.mxu0 0.0
        %599 = vmatpush1.xpose.msra.mxu0 0.0
        %600 = vmatprep.subr.mxu0 0.0
        %601 = vmatpush1.xpose.msra.mxu0 0.0
        %602 = vmatprep.subr.mxu0 0.0
        %603 = vmatpush1.xpose.msra.mxu0 0.0
        %604 = vmatprep.subr.mxu0 0.0
        %605 = vmatpush1.xpose.msra.mxu0 0.0
        %606 = vmatprep.subr.mxu0 0.0
        %607 = vmatpush1.xpose.msra.mxu0 0.0
        %608 = vmatprep.subr.mxu0 0.0
        %609 = vmatpush1.xpose.msra.mxu0 0.0
        %610 = vmatprep.subr.mxu0 0.0
        %611 = vmatpush1.xpose.msra.mxu0 0.0
        %612 = vmatprep.subr.mxu0 0.0
        %613 = vmatpush1.xpose.msra.mxu0 0.0
        %614 = vmatprep.subr.mxu0 0.0
        %615 = vmatpush1.xpose.msra.mxu0 0.0
        %616 = vmatprep.subr.mxu0 0.0
        %617 = vmatpush1.xpose.msra.mxu0 0.0
        %618 = vmatprep.subr.mxu0 0.0
        %619 = vmatpush1.xpose.msra.mxu0 0.0
        %620 = vmatprep.subr.mxu0 0.0
        %621 = vmatpush1.xpose.msra.mxu0 0.0
        %622 = vmatprep.subr.mxu0 0.0
        %623 = vmatpush1.xpose.msra.mxu0 0.0
        %624 = vmatprep.subr.mxu0 0.0
        %625 = vmatpush1.xpose.msra.mxu0 0.0
        %626 = vmatprep.subr.mxu0 0.0
        %627 = vmatpush1.xpose.msra.mxu0 %v594
        %628 = vmatprep.subr.mxu0 0.0
        %629 = vmatpush2.xpose.msra.mxu0 0.0
        %630 = vmatprep.subr.mxu0 0.0
        %631 = vmatpush2.xpose.msra.mxu0 0.0
        %632 = vmatprep.subr.mxu0 0.0
        %633 = vmatpush2.xpose.msra.mxu0 0.0
        %634 = vmatprep.subr.mxu0 0.0
        %635 = vmatpush2.xpose.msra.mxu0 0.0
        %636 = vmatprep.subr.mxu0 0.0
        %637 = vmatpush2.xpose.msra.mxu0 0.0
        %638 = vmatprep.subr.mxu0 0.0
        %639 = vmatpush2.xpose.msra.mxu0 0.0
        %640 = vmatprep.subr.mxu0 0.0
        %641 = vmatpush2.xpose.msra.mxu0 0.0
        %642 = vmatprep.subr.mxu0 0.0
        %643 = vmatpush2.xpose.msra.mxu0 0.0
        %644 = vmatprep.subr.mxu0 0.0
        %645 = vmatpush2.xpose.msra.mxu0 0.0
        %646 = vmatprep.subr.mxu0 0.0
        %647 = vmatpush2.xpose.msra.mxu0 0.0
        %648 = vmatprep.subr.mxu0 0.0
        %649 = vmatpush2.xpose.msra.mxu0 0.0
        %650 = vmatprep.subr.mxu0 0.0
        %651 = vmatpush2.xpose.msra.mxu0 0.0
        %652 = vmatprep.subr.mxu0 0.0
        %653 = vmatpush2.xpose.msra.mxu0 0.0
        %654 = vmatprep.subr.mxu0 0.0
        %655 = vmatpush2.xpose.msra.mxu0 0.0
        %656 = vmatprep.subr.mxu0 0.0
        %657 = vmatpush2.xpose.msra.mxu0 0.0
        %658 = vmatprep.subr.mxu0 0.0
        %659 = vmatpush2.xpose.msra.mxu0 0.0
        %660 = vmatprep.mubr.f32.mxu0 0.0
        %661 = vmatmul.mubr.f32.gmra.mxu0 %v391
        %v662 = vpop.f32.mrf.mxu0
        %v663 = vadd.f32 0.0, %v662
        %v664 = vpop.f32.mrf.mxu0
        %665 = vdwg.mxu0
        %v666 = vsub.f32 %v663, %v365
        %s667 = scalar_lea.vmem %s257, 16 [#allocation2]
        %668 = vst.msk [vmem:[%s667] sm:$0xff] %vm467, %v666
        %v669 = vsel %vm590, 1e+30, %v569
        %v670 = vsel %vm366, %v669, inf
        %671 = vmin.xlane.f32.xlu0 %v670
        %v672 = vpop.xlane.xlu0 %671
        %vm673 = vcmp.eq.f32.partialorder %v669, %v672
        %v674 = vsel %vm673, %v362, 16
        %v675 = vsel %vm366, %v674, 2147483647
        %v676 = vand.u32 %v675, 65535
        %v677 = vshra.s32 %v675, 16
        %v678 = vcvt.s32.f32 %v676
        %v679 = vcvt.s32.f32 %v677
        %680 = vmin.xlane.f32.xlu0 %v679
        %v681 = vpop.xlane.xlu0 %680
        %vm682 = vcmp.eq.f32.partialorder %v679, %v681
        %v683 = vsel %vm682, %v678, inf
        %684 = vmin.xlane.f32.xlu0 %v683
        %v685 = vpop.xlane.xlu0 %684
        %v686 = vcvt.f32.s32 %v685
        %v687 = vcvt.f32.s32 %v681
        %v688 = vshll.u32 %v687, 16
        %v689 = vadd.s32 %v688, %v686
        %vm690 = vcmp.eq.s32.totalorder %v674, %v689
        %v691 = vsel %vm690, 1, 0
        %v692 = vcvt.s32.f32 %v691
        %v694 = vsel %vm366, %v692, 0
        %696 = vmatprep.subr.mxu0 0.0
        %697 = vmatpush1.xpose.msra.mxu0 0.0
        %698 = vmatprep.subr.mxu0 0.0
        %699 = vmatpush1.xpose.msra.mxu0 0.0
        %700 = vmatprep.subr.mxu0 0.0
        %701 = vmatpush1.xpose.msra.mxu0 0.0
        %702 = vmatprep.subr.mxu0 0.0
        %703 = vmatpush1.xpose.msra.mxu0 0.0
        %704 = vmatprep.subr.mxu0 0.0
        %705 = vmatpush1.xpose.msra.mxu0 0.0
        %706 = vmatprep.subr.mxu0 0.0
        %707 = vmatpush1.xpose.msra.mxu0 0.0
        %708 = vmatprep.subr.mxu0 0.0
        %709 = vmatpush1.xpose.msra.mxu0 0.0
        %710 = vmatprep.subr.mxu0 0.0
        %711 = vmatpush1.xpose.msra.mxu0 0.0
        %712 = vmatprep.subr.mxu0 0.0
        %713 = vmatpush1.xpose.msra.mxu0 0.0
        %714 = vmatprep.subr.mxu0 0.0
        %715 = vmatpush1.xpose.msra.mxu0 0.0
        %716 = vmatprep.subr.mxu0 0.0
        %717 = vmatpush1.xpose.msra.mxu0 0.0
        %718 = vmatprep.subr.mxu0 0.0
        %719 = vmatpush1.xpose.msra.mxu0 0.0
        %720 = vmatprep.subr.mxu0 0.0
        %721 = vmatpush1.xpose.msra.mxu0 0.0
        %722 = vmatprep.subr.mxu0 0.0
        %723 = vmatpush1.xpose.msra.mxu0 0.0
        %724 = vmatprep.subr.mxu0 0.0
        %725 = vmatpush1.xpose.msra.mxu0 0.0
        %726 = vmatprep.subr.mxu0 0.0
        %727 = vmatpush1.xpose.msra.mxu0 %v694
        %728 = vmatprep.subr.mxu0 0.0
        %729 = vmatpush2.xpose.msra.mxu0 0.0
        %730 = vmatprep.subr.mxu0 0.0
        %731 = vmatpush2.xpose.msra.mxu0 0.0
        %732 = vmatprep.subr.mxu0 0.0
        %733 = vmatpush2.xpose.msra.mxu0 0.0
        %734 = vmatprep.subr.mxu0 0.0
        %735 = vmatpush2.xpose.msra.mxu0 0.0
        %736 = vmatprep.subr.mxu0 0.0
        %737 = vmatpush2.xpose.msra.mxu0 0.0
        %738 = vmatprep.subr.mxu0 0.0
        %739 = vmatpush2.xpose.msra.mxu0 0.0
        %740 = vmatprep.subr.mxu0 0.0
        %741 = vmatpush2.xpose.msra.mxu0 0.0
        %742 = vmatprep.subr.mxu0 0.0
        %743 = vmatpush2.xpose.msra.mxu0 0.0
        %744 = vmatprep.subr.mxu0 0.0
        %745 = vmatpush2.xpose.msra.mxu0 0.0
        %746 = vmatprep.subr.mxu0 0.0
        %747 = vmatpush2.xpose.msra.mxu0 0.0
        %748 = vmatprep.subr.mxu0 0.0
        %749 = vmatpush2.xpose.msra.mxu0 0.0
        %750 = vmatprep.subr.mxu0 0.0
        %751 = vmatpush2.xpose.msra.mxu0 0.0
        %752 = vmatprep.subr.mxu0 0.0
        %753 = vmatpush2.xpose.msra.mxu0 0.0
        %754 = vmatprep.subr.mxu0 0.0
        %755 = vmatpush2.xpose.msra.mxu0 0.0
        %756 = vmatprep.subr.mxu0 0.0
        %757 = vmatpush2.xpose.msra.mxu0 0.0
        %758 = vmatprep.subr.mxu0 0.0
        %759 = vmatpush2.xpose.msra.mxu0 0.0
        %760 = vmatprep.mubr.f32.mxu0 0.0
        %761 = vmatmul.mubr.f32.gmra.mxu0 %v391
        %v762 = vpop.f32.mrf.mxu0
        %v763 = vadd.f32 0.0, %v762
        %v764 = vpop.f32.mrf.mxu0
        %765 = vdwg.mxu0
        %v766 = vsub.f32 %v763, %v365
        %s767 = scalar_lea.vmem %s257, 24 [#allocation2]
        %768 = vst.msk [vmem:[%s767] sm:$0xff] %vm467, %v766
        %s769 = sand.u32 %s148, 1
        %s770 = scalar_lea.sflag [#allocation3], %s769
        %s771 = sand.u32 %s148, 1
        %s772 = smul.addr %s771, 32
        %s773 = scalar_lea.vmem [#allocation2], %s772
        // Predicated region
        $region37: #{tpu_custom_call.1} parent=35 // pred_check
          %p774 = pneg %p158
        $region38: #{tpu_custom_call.1} parent=35 // pred_check_branch
          %776 = sbr.rel (%p774) target = $region40
        $region39: #{tpu_custom_call.1} parent=35 // pred_region
          %s778 = ssub.s32 512, 512
          %779 = vsyncadd %s770, %s778
          %s780 = smul.addr %s22, 4
          %s781 = sadd.s32 %s23, %s780
          %s782 = smul.addr %s781, 128
          %s783 = scalar_lea.hbm %s4, %s782
          %s784 = sshll.u32 %s773, 4
          %s785 = int_to_ptr.vmem [resolvable:$true] %s784
          %790 = dma.vmem_to_hbm [thread:$0]  %s785, 512, %s783, %s770, 128, 128, 8
        $region40: #{tpu_custom_call.1} parent=35 // pred_fallthru
          _
      $region36: #{tpu_custom_call.1} parent=5 // pred_fallthru
        _
      %p791 = scmp.le.s32.totalorder 2, %s13
      // Predicated region
      $region41: #{tpu_custom_call.1} parent=5 // pred_check
        %p792 = pneg %p791
      $region42: #{tpu_custom_call.1} parent=5 // pred_check_branch
        %794 = sbr.rel (%p792) target = $region44
      $region43: #{tpu_custom_call.1} parent=5 // pred_region
        %s795 = ssub.s32 %s13, 2
        // Predicated region
        $region45: #{tpu_custom_call.1} parent=43 // pred_check
          %p796 = pneg %p164
        $region46: #{tpu_custom_call.1} parent=43 // pred_check_branch
          %798 = sbr.rel (%p796) target = $region48
        $region47: #{tpu_custom_call.1} parent=43 // pred_region
          %s799 = sand.u32 %s149, 1
          %s800 = scalar_lea.sflag [#allocation3], %s799
          %s801 = sand.u32 %s149, 1
          %s802 = smul.addr %s801, 32
          %s803 = scalar_lea.vmem [#allocation2], %s802
          %804 = dma.done %s800, 512
        $region48: #{tpu_custom_call.1} parent=43 // pred_fallthru
          _
      $region44: #{tpu_custom_call.1} parent=5 // pred_fallthru
        _
    $region6: #{tpu_custom_call.1} parent=1 // loop_footer
      %s17 = sadd.s32 1, %s13
    $region7: #{tpu_custom_call.1} parent=1 // loop_footer_branch
      %12 = sbr.rel target = $region3
    $region8: #{tpu_custom_call.1} parent=1 // loop_exit
      _
    %805 = vsyncpa [#allocation3], 1
    %s806 = scalar_lea.sflag [#allocation3], 1
    %807 = vsyncpa %s806, 1

// kernel: tpu_custom_call.1
$region0: #{tpu_custom_call.1}
  #allocation0 [shape = 'u32[]', space=smem, size = 0x4, offset = 0x4, fixed_abs, tag = 'smem constant byte address 0x4 - core index']
  #allocation1 [shape = 'u32[144,128]{1,0:T(1,128)}', space=vmem, size = 0x12000, scoped, tag = 'internal scratch']
  %s0 = inlined_call_operand.vmem [shape: f32[2,8,4], index: 0, kind: input, shape index: {}]
  %s1 = inlined_call_operand.vmem [shape: f32[2,4,16], index: 1, kind: input, shape index: {}]
  %s2 = inlined_call_operand.vmem [shape: f32[2,8,16], index: 2, kind: input, shape index: {}]
  %s3 = inlined_call_operand.vmem [shape: f32[2,3,8], index: 3, kind: input, shape index: {}]
  %s4 = inlined_call_operand.hbm [shape: f32[2,4,8,8], index: 4, kind: output, shape index: {}]
  %s5 = sld [smem:[#allocation0]]
  $region49: #{tpu_custom_call.1} parent=0
    _
  %s7 = ssub.s32 1, %s5
  %s8 = scalar_select 0, %s7, %s5
  $region1: #{tpu_custom_call.1} parent=0
    #allocation2 [shape = 'u8[32768]{0}', space=vmem, size = 0x8000, scoped, tag = 'output window, operand 0']
    #allocation3 [shape = 's32[2]{0}', space=sflag, size = 0x8, scoped, tag = 'scoped memory for tpu_custom_call.1']
    %9 = vsyncpa [#allocation3], 0
    %s10 = scalar_lea.sflag [#allocation3], 1
    %11 = vsyncpa %s10, 0
    loop: start=0, step=1, limit=4
    $region2: #{tpu_custom_call.1} parent=1 // loop_pre_header
      _
    $region3: #{tpu_custom_call.1} parent=1 // loop_header
      %s13 = sphi 0, %s17
      %p14 = scmp.ge.s32.totalorder %s13, 4
      %s20 = sphi 0, %s32
      %s21 = sphi 0, %s28
      %s22 = sphi 0, %s20
      %s23 = sphi 0, %s21
      %s24 = sphi 0, %s22
      %s25 = sphi 0, %s23
      %s37 = sphi 0, %s39
      %s40 = sphi 0, %s37
      %s41 = sphi 0, %s40
      %s57 = sphi 0, %s41
      %s63 = sphi 0, %s65
      %s66 = sphi 0, %s63
      %s67 = sphi 0, %s66
      %s83 = sphi 0, %s67
      %s89 = sphi 0, %s91
      %s92 = sphi 0, %s89
      %s93 = sphi 0, %s92
      %s109 = sphi 0, %s93
      %s117 = sphi 0, %s119
      %s120 = sphi 0, %s117
      %s121 = sphi 0, %s120
      %s137 = sphi 0, %s121
      %s145 = sphi 0, %s147
      %s148 = sphi 0, %s145
      %s149 = sphi 0, %s148
      %s165 = sphi 0, %s149
    $region4: #{tpu_custom_call.1} parent=1 // loop_header_branch
      %16 = sbr.rel (%p14) target = $region8
    $region5: #{tpu_custom_call.1} parent=1 // loop_body
      %s18 = ssub.s32 %s13, 1
      %s19 = ssub.s32 %s13, 2
      %s26 = sadd.s32 1, %s21
      %p27 = scmp.ge.s32.totalorder %s26, 1
      %s28 = scalar_select %p27, 0, %s26
      %s29 = sadd.s32 1, %s20
      %s30 = scalar_select %p27, %s29, %s20
      %p31 = scmp.ge.s32.totalorder %s30, 2
      %s32 = scalar_select %p31, 0, %s30
      %s33 = ssub.s32 %s20, %s32
      %s34 = ssub.s32 %s21, %s28
      %s35 = sor.u32 %s33, %s34
      %p36 = scmp.eq.s32.totalorder %s35, 0
      %s38 = sadd.s32 %s37, 1
      %s39 = scalar_select %p36, %s37, %s38
      %p42 = pneg %p36
      %p43 = scmp.eq.s32.totalorder %s13, 1
      %p44 = por %p42, %p43
      %p45 = scmp.ne.s32.totalorder %s37, %s40
      %p46 = scmp.eq.s32.totalorder %s13, 0
      %p47 = por %p45, %p46
      %p48 = scmp.ne.s32.totalorder %s37, %s40
      %p49 = scmp.eq.s32.totalorder %s18, 1
      %p50 = por %p48, %p49
      %p51 = scmp.ne.s32.totalorder %s40, %s41
      %p52 = scmp.eq.s32.totalorder %s18, 0
      %p53 = por %p51, %p52
      %p54 = scmp.ne.s32.totalorder %s40, %s41
      %p55 = scmp.eq.s32.totalorder %s19, 1
      %p56 = por %p54, %p55
      %p58 = scmp.ne.s32.totalorder %s41, %s57
      %p59 = scmp.eq.s32.totalorder %s19, 0
      %p60 = por %p58, %p59
      %s61 = ssub.s32 %s20, %s32
      %p62 = scmp.eq.s32.totalorder %s61, 0
      %s64 = sadd.s32 %s63, 1
      %s65 = scalar_select %p62, %s63, %s64
      %p68 = pneg %p62
      %p69 = scmp.eq.s32.totalorder %s13, 1
      %p70 = por %p68, %p69
      %p71 = scmp.ne.s32.totalorder %s63, %s66
      %p72 = scmp.eq.s32.totalorder %s13, 0
      %p73 = por %p71, %p72
      %p74 = scmp.ne.s32.totalorder %s63, %s66
      %p75 = scmp.eq.s32.totalorder %s18, 1
      %p76 = por %p74, %p75
      %p77 = scmp.ne.s32.totalorder %s66, %s67
      %p78 = scmp.eq.s32.totalorder %s18, 0
      %p79 = por %p77, %p78
      %p80 = scmp.ne.s32.totalorder %s66, %s67
      %p81 = scmp.eq.s32.totalorder %s19, 1
      %p82 = por %p80, %p81
      %p84 = scmp.ne.s32.totalorder %s67, %s83
      %p85 = scmp.eq.s32.totalorder %s19, 0
      %p86 = por %p84, %p85
      %s87 = ssub.s32 %s20, %s32
      %p88 = scmp.eq.s32.totalorder %s87, 0
      %s90 = sadd.s32 %s89, 1
      %s91 = scalar_select %p88, %s89, %s90
      %p94 = pneg %p88
      %p95 = scmp.eq.s32.totalorder %s13, 1
      %p96 = por %p94, %p95
      %p97 = scmp.ne.s32.totalorder %s89, %s92
      %p98 = scmp.eq.s32.totalorder %s13, 0
      %p99 = por %p97, %p98
      %p100 = scmp.ne.s32.totalorder %s89, %s92
      %p101 = scmp.eq.s32.totalorder %s18, 1
      %p102 = por %p100, %p101
      %p103 = scmp.ne.s32.totalorder %s92, %s93
      %p104 = scmp.eq.s32.totalorder %s18, 0
      %p105 = por %p103, %p104
      %p106 = scmp.ne.s32.totalorder %s92, %s93
      %p107 = scmp.eq.s32.totalorder %s19, 1
      %p108 = por %p106, %p107
      %p110 = scmp.ne.s32.totalorder %s93, %s109
      %p111 = scmp.eq.s32.totalorder %s19, 0
      %p112 = por %p110, %p111
      %s113 = ssub.s32 %s20, %s32
      %s114 = ssub.s32 %s21, %s28
      %s115 = sor.u32 %s113, %s114
      %p116 = scmp.eq.s32.totalorder %s115, 0
      %s118 = sadd.s32 %s117, 1
      %s119 = scalar_select %p116, %s117, %s118
      %p122 = pneg %p116
      %p123 = scmp.eq.s32.totalorder %s13, 1
      %p124 = por %p122, %p123
      %p125 = scmp.ne.s32.totalorder %s117, %s120
      %p126 = scmp.eq.s32.totalorder %s13, 0
      %p127 = por %p125, %p126
      %p128 = scmp.ne.s32.totalorder %s117, %s120
      %p129 = scmp.eq.s32.totalorder %s18, 1
      %p130 = por %p128, %p129
      %p131 = scmp.ne.s32.totalorder %s120, %s121
      %p132 = scmp.eq.s32.totalorder %s18, 0
      %p133 = por %p131, %p132
      %p134 = scmp.ne.s32.totalorder %s120, %s121
      %p135 = scmp.eq.s32.totalorder %s19, 1
      %p136 = por %p134, %p135
      %p138 = scmp.ne.s32.totalorder %s121, %s137
      %p139 = scmp.eq.s32.totalorder %s19, 0
      %p140 = por %p138, %p139
      %s141 = ssub.s32 %s20, %s32
      %s142 = ssub.s32 %s21, %s28
      %s143 = sor.u32 %s141, %s142
      %p144 = scmp.eq.s32.totalorder %s143, 0
      %s146 = sadd.s32 %s145, 1
      %s147 = scalar_select %p144, %s145, %s146
      %p150 = pneg %p144
      %p151 = scmp.eq.s32.totalorder %s13, 1
      %p152 = por %p150, %p151
      %p153 = scmp.ne.s32.totalorder %s145, %s148
      %p154 = scmp.eq.s32.totalorder %s13, 0
      %p155 = por %p153, %p154
      %p156 = scmp.ne.s32.totalorder %s145, %s148
      %p157 = scmp.eq.s32.totalorder %s18, 1
      %p158 = por %p156, %p157
      %p159 = scmp.ne.s32.totalorder %s148, %s149
      %p160 = scmp.eq.s32.totalorder %s18, 0
      %p161 = por %p159, %p160
      %p162 = scmp.ne.s32.totalorder %s148, %s149
      %p163 = scmp.eq.s32.totalorder %s19, 1
      %p164 = por %p162, %p163
      %p166 = scmp.ne.s32.totalorder %s149, %s165
      %p167 = scmp.eq.s32.totalorder %s19, 0
      %p168 = por %p166, %p167
      %p169 = scmp.le.s32.totalorder 1, %s13
      %p170 = scmp.lt.s32.totalorder %s13, 3
      %p171 = pnand %p169, %p170
      %p172 = pneg %p171
      // Predicated region
      $region9: #{tpu_custom_call.1} parent=5 // pred_check
        _
      $region10: #{tpu_custom_call.1} parent=5 // pred_check_branch
        %174 = sbr.rel (%p171) target = $region12
      $region11: #{tpu_custom_call.1} parent=5 // pred_region
        %s175 = ssub.s32 %s13, 1
      $region12: #{tpu_custom_call.1} parent=5 // pred_fallthru
        _
      %p176 = scmp.lt.s32.totalorder %s13, 2
      // Predicated region
      $region13: #{tpu_custom_call.1} parent=5 // pred_check
        %p177 = pneg %p176
      $region14: #{tpu_custom_call.1} parent=5 // pred_check_branch
        %179 = sbr.rel (%p177) target = $region16
      $region15: #{tpu_custom_call.1} parent=5 // pred_region
        // Predicated region
        $region17: #{tpu_custom_call.1} parent=15 // pred_check
          %p180 = pneg %p47
        $region18: #{tpu_custom_call.1} parent=15 // pred_check_branch
          %182 = sbr.rel (%p180) target = $region20
        $region19: #{tpu_custom_call.1} parent=15 // pred_region
          %p183 = scmp.lt.s32.totalorder %s20, 1
          %s184 = scalar_select %p183, %s20, 1
          %p185 = scmp.lt.s32.totalorder %s21, 0
          %s186 = scalar_select %p185, %s21, 0
          %s187 = sadd.s32 %s186, %s184
          %s188 = smul.addr %s187, 8
          %s189 = scalar_lea.vmem %s0, %s188
        $region20: #{tpu_custom_call.1} parent=15 // pred_fallthru
          _
        // Predicated region
        $region21: #{tpu_custom_call.1} parent=15 // pred_check
          %p190 = pneg %p73
        $region22: #{tpu_custom_call.1} parent=15 // pred_check_branch
          %192 = sbr.rel (%p190) target = $region24
        $region23: #{tpu_custom_call.1} parent=15 // pred_region
          %p193 = scmp.lt.s32.totalorder %s20, 1
          %s194 = scalar_select %p193, %s20, 1
          %s195 = smul.addr %s194, 4
          %s196 = scalar_lea.vmem %s1, %s195
        $region24: #{tpu_custom_call.1} parent=15 // pred_fallthru
          _
        // Predicated region
        $region25: #{tpu_custom_call.1} parent=15 // pred_check
          %p197 = pneg %p99
        $region26: #{tpu_custom_call.1} parent=15 // pred_check_branch
          %199 = sbr.rel (%p197) target = $region28
        $region27: #{tpu_custom_call.1} parent=15 // pred_region
          %p200 = scmp.lt.s32.totalorder %s20, 1
          %s201 = scalar_select %p200, %s20, 1
          %s202 = smul.addr %s201, 8
          %s203 = scalar_lea.vmem %s2, %s202
        $region28: #{tpu_custom_call.1} parent=15 // pred_fallthru
          _
        // Predicated region
        $region29: #{tpu_custom_call.1} parent=15 // pred_check
          %p204 = pneg %p127
        $region30: #{tpu_custom_call.1} parent=15 // pred_check_branch
          %206 = sbr.rel (%p204) target = $region32
        $region31: #{tpu_custom_call.1} parent=15 // pred_region
          %p207 = scmp.lt.s32.totalorder %s20, 1
          %s208 = scalar_select %p207, %s20, 1
          %p209 = scmp.lt.s32.totalorder %s21, 0
          %s210 = scalar_select %p209, %s21, 0
          %s211 = sadd.s32 %s210, %s208
          %s212 = smul.addr %s211, 4
          %s213 = scalar_lea.vmem %s3, %s212
        $region32: #{tpu_custom_call.1} parent=15 // pred_fallthru
          _
      $region16: #{tpu_custom_call.1} parent=5 // pred_fallthru
        _
      %p214 = scmp.le.s32.totalorder 1, %s13
      %p215 = scmp.lt.s32.totalorder %s13, 3
      %p216 = pnand %p214, %p215
      %p217 = pneg %p216
      // Predicated region
      $region33: #{tpu_custom_call.1} parent=5 // pred_check
        _
      $region34: #{tpu_custom_call.1} parent=5 // pred_check_branch
        %219 = sbr.rel (%p216) target = $region36
      $region35: #{tpu_custom_call.1} parent=5 // pred_region
        %s220 = ssub.s32 %s13, 1
        %p221 = scmp.lt.s32.totalorder %s22, 1
        %s222 = scalar_select %p221, %s22, 1
        %p223 = scmp.lt.s32.totalorder %s23, 0
        %s224 = scalar_select %p223, %s23, 0
        %s225 = sadd.s32 %s224, %s222
        %s226 = smul.addr %s225, 8
        %s227 = scalar_lea.vmem %s0, %s226
        %p228 = pneg %p53
        %p229 = pneg %p50
        %p230 = scmp.lt.s32.totalorder %s22, 1
        %s231 = scalar_select %p230, %s22, 1
        %s232 = smul.addr %s231, 4
        %s233 = scalar_lea.vmem %s1, %s232
        %p234 = pneg %p79
        %p235 = pneg %p76
        %p236 = scmp.lt.s32.totalorder %s22, 1
        %s237 = scalar_select %p236, %s22, 1
        %s238 = smul.addr %s237, 8
        %s239 = scalar_lea.vmem %s2, %s238
        %p240 = pneg %p105
        %p241 = pneg %p102
        %p242 = scmp.lt.s32.totalorder %s22, 1
        %s243 = scalar_select %p242, %s22, 1
        %p244 = scmp.lt.s32.totalorder %s23, 0
        %s245 = scalar_select %p244, %s23, 0
        %s246 = sadd.s32 %s245, %s243
        %s247 = smul.addr %s246, 4
        %s248 = scalar_lea.vmem %s3, %s247
        %p249 = pneg %p133
        %p250 = pneg %p130
        %p251 = pneg %p161
        %p252 = pneg %p158
        %s253 = sand.u32 %s148, 1
        %s254 = scalar_lea.sflag [#allocation3], %s253
        %s255 = sand.u32 %s148, 1
        %s256 = smul.addr %s255, 32
        %s257 = scalar_lea.vmem [#allocation2], %s256
        %p258 = scmp.lt.s32.totalorder %s22, 1
        %s259 = scalar_select %p258, %s22, 1
        %p260 = scmp.lt.s32.totalorder %s23, 0
        %s261 = scalar_select %p260, %s23, 0
        %s262 = sadd.s32 %s261, %s259
        %s263 = smul.addr %s262, 8
        %s264 = scalar_lea.vmem %s0, %s263
        %p265 = scmp.lt.s32.totalorder %s22, 1
        %s266 = scalar_select %p265, %s22, 1
        %s267 = smul.addr %s266, 4
        %s268 = scalar_lea.vmem %s1, %s267
        %p269 = scmp.lt.s32.totalorder %s22, 1
        %s270 = scalar_select %p269, %s22, 1
        %s271 = smul.addr %s270, 8
        %s272 = scalar_lea.vmem %s2, %s271
        %p273 = scmp.lt.s32.totalorder %s22, 1
        %s274 = scalar_select %p273, %s22, 1
        %p275 = scmp.lt.s32.totalorder %s23, 0
        %s276 = scalar_select %p275, %s23, 0
        %s277 = sadd.s32 %s276, %s274
        %s278 = smul.addr %s277, 4
        %s279 = scalar_lea.vmem %s3, %s278
        %v280 = vld [vmem:[%s264] sm:$0xff]
        %v281 = vld [vmem:[%s268] sm:$0xf]
        %v282 = vld [vmem:[%s272] sm:$0xff]
        %vm283 = vcmask 31744
        %v285 = vsel %vm283, %v280, 0
        %vm287 = vcmask 1043456
        %v289 = vsel %vm287, %v281, 0
        %291 = vmatprep.subr.mxu0 0.0
        %292 = vmatpush1.msra.mxu0 0.0
        %293 = vmatprep.subr.mxu0 0.0
        %294 = vmatpush1.msra.mxu0 0.0
        %295 = vmatprep.subr.mxu0 0.0
        %296 = vmatpush1.msra.mxu0 0.0
        %297 = vmatprep.subr.mxu0 0.0
        %298 = vmatpush1.msra.mxu0 0.0
        %299 = vmatprep.subr.mxu0 0.0
        %300 = vmatpush1.msra.mxu0 0.0
        %301 = vmatprep.subr.mxu0 0.0
        %302 = vmatpush1.msra.mxu0 0.0
        %303 = vmatprep.subr.mxu0 0.0
        %304 = vmatpush1.msra.mxu0 0.0
        %305 = vmatprep.subr.mxu0 0.0
        %306 = vmatpush1.msra.mxu0 0.0
        %307 = vmatprep.subr.mxu0 0.0
        %308 = vmatpush1.msra.mxu0 0.0
        %309 = vmatprep.subr.mxu0 0.0
        %310 = vmatpush1.msra.mxu0 0.0
        %311 = vmatprep.subr.mxu0 0.0
        %312 = vmatpush1.msra.mxu0 0.0
        %313 = vmatprep.subr.mxu0 0.0
        %314 = vmatpush1.msra.mxu0 0.0
        %315 = vmatprep.subr.mxu0 0.0
        %316 = vmatpush1.msra.mxu0 0.0
        %317 = vmatprep.subr.mxu0 0.0
        %318 = vmatpush1.msra.mxu0 0.0
        %319 = vmatprep.subr.mxu0 0.0
        %320 = vmatpush1.msra.mxu0 0.0
        %321 = vmatprep.subr.mxu0 0.0
        %322 = vmatpush1.msra.mxu0 %v289
        %323 = vmatprep.subr.mxu0 0.0
        %324 = vmatpush2.msra.mxu0 0.0
        %325 = vmatprep.subr.mxu0 0.0
        %326 = vmatpush2.msra.mxu0 0.0
        %327 = vmatprep.subr.mxu0 0.0
        %328 = vmatpush2.msra.mxu0 0.0
        %329 = vmatprep.subr.mxu0 0.0
        %330 = vmatpush2.msra.mxu0 0.0
        %331 = vmatprep.subr.mxu0 0.0
        %332 = vmatpush2.msra.mxu0 0.0
        %333 = vmatprep.subr.mxu0 0.0
        %334 = vmatpush2.msra.mxu0 0.0
        %335 = vmatprep.subr.mxu0 0.0
        %336 = vmatpush2.msra.mxu0 0.0
        %337 = vmatprep.subr.mxu0 0.0
        %338 = vmatpush2.msra.mxu0 0.0
        %339 = vmatprep.subr.mxu0 0.0
        %340 = vmatpush2.msra.mxu0 0.0
        %341 = vmatprep.subr.mxu0 0.0
        %342 = vmatpush2.msra.mxu0 0.0
        %343 = vmatprep.subr.mxu0 0.0
        %344 = vmatpush2.msra.mxu0 0.0
        %345 = vmatprep.subr.mxu0 0.0
        %346 = vmatpush2.msra.mxu0 0.0
        %347 = vmatprep.subr.mxu0 0.0
        %348 = vmatpush2.msra.mxu0 0.0
        %349 = vmatprep.subr.mxu0 0.0
        %350 = vmatpush2.msra.mxu0 0.0
        %351 = vmatprep.subr.mxu0 0.0
        %352 = vmatpush2.msra.mxu0 0.0
        %353 = vmatprep.subr.mxu0 0.0
        %354 = vmatpush2.msra.mxu0 0.0
        %355 = vmatprep.mubr.f32.mxu0 0.0
        %356 = vmatmul.mubr.f32.gmra.mxu0 %v285
        %v357 = vpop.f32.mrf.mxu0
        %v358 = vadd.f32 0.0, %v357
        %v359 = vpop.f32.mrf.mxu0
        %360 = vdwg.mxu0
        %v361 = vlaneseq
        %v362 = vand.u32 %v361, 127
        %v363 = vld [vmem:[%s279] sm:$0x7]
        %vm364 = vcmask 1042432
        %v365 = vsel %vm364, %v363, 0.0
        %vm366 = vcmask 130048
        %v367 = vsel %vm366, %v358, inf
        %368 = vmin.xlane.f32.xlu0 %v367
        %v369 = vpop.xlane.xlu0 %368
        %vm370 = vcmp.eq.f32.partialorder %v358, %v369
        %v371 = vsel %vm370, %v362, 16
        %v372 = vsel %vm366, %v371, 2147483647
        %v373 = vand.u32 %v372, 65535
        %v374 = vshra.s32 %v372, 16
        %v375 = vcvt.s32.f32 %v373
        %v376 = vcvt.s32.f32 %v374
        %377 = vmin.xlane.f32.xlu0 %v376
        %v378 = vpop.xlane.xlu0 %377
        %vm379 = vcmp.eq.f32.partialorder %v376, %v378
        %v380 = vsel %vm379, %v375, inf
        %381 = vmin.xlane.f32.xlu0 %v380
        %v382 = vpop.xlane.xlu0 %381
        %v383 = vcvt.f32.s32 %v382
        %v384 = vcvt.f32.s32 %v378
        %v385 = vshll.u32 %v384, 16
        %v386 = vadd.s32 %v385, %v383
        %vm387 = vcmp.eq.s32.totalorder %v371, %v386
        %v388 = vsel %vm387, 1, 0
        %v389 = vcvt.s32.f32 %v388
        %v391 = vsel %vm366, %v282, 0
        %v394 = vsel %vm366, %v389, 0
        %396 = vmatprep.subr.mxu0 0.0
        %397 = vmatpush1.xpose.msra.mxu0 0.0
        %398 = vmatprep.subr.mxu0 0.0
        %399 = vmatpush1.xpose.msra.mxu0 0.0
        %400 = vmatprep.subr.mxu0 0.0
        %401 = vmatpush1.xpose.msra.mxu0 0.0
        %402 = vmatprep.subr.mxu0 0.0
        %403 = vmatpush1.xpose.msra.mxu0 0.0
        %404 = vmatprep.subr.mxu0 0.0
        %405 = vmatpush1.xpose.msra.mxu0 0.0
        %406 = vmatprep.subr.mxu0 0.0
        %407 = vmatpush1.xpose.msra.mxu0 0.0
        %408 = vmatprep.subr.mxu0 0.0
        %409 = vmatpush1.xpose.msra.mxu0 0.0
        %410 = vmatprep.subr.mxu0 0.0
        %411 = vmatpush1.xpose.msra.mxu0 0.0
        %412 = vmatprep.subr.mxu0 0.0
        %413 = vmatpush1.xpose.msra.mxu0 0.0
        %414 = vmatprep.subr.mxu0 0.0
        %415 = vmatpush1.xpose.msra.mxu0 0.0
        %416 = vmatprep.subr.mxu0 0.0
        %417 = vmatpush1.xpose.msra.mxu0 0.0
        %418 = vmatprep.subr.mxu0 0.0
        %419 = vmatpush1.xpose.msra.mxu0 0.0
        %420 = vmatprep.subr.mxu0 0.0
        %421 = vmatpush1.xpose.msra.mxu0 0.0
        %422 = vmatprep.subr.mxu0 0.0
        %423 = vmatpush1.xpose.msra.mxu0 0.0
        %424 = vmatprep.subr.mxu0 0.0
        %425 = vmatpush1.xpose.msra.mxu0 0.0
        %426 = vmatprep.subr.mxu0 0.0
        %427 = vmatpush1.xpose.msra.mxu0 %v394
        %428 = vmatprep.subr.mxu0 0.0
        %429 = vmatpush2.xpose.msra.mxu0 0.0
        %430 = vmatprep.subr.mxu0 0.0
        %431 = vmatpush2.xpose.msra.mxu0 0.0
        %432 = vmatprep.subr.mxu0 0.0
        %433 = vmatpush2.xpose.msra.mxu0 0.0
        %434 = vmatprep.subr.mxu0 0.0
        %435 = vmatpush2.xpose.msra.mxu0 0.0
        %436 = vmatprep.subr.mxu0 0.0
        %437 = vmatpush2.xpose.msra.mxu0 0.0
        %438 = vmatprep.subr.mxu0 0.0
        %439 = vmatpush2.xpose.msra.mxu0 0.0
        %440 = vmatprep.subr.mxu0 0.0
        %441 = vmatpush2.xpose.msra.mxu0 0.0
        %442 = vmatprep.subr.mxu0 0.0
        %443 = vmatpush2.xpose.msra.mxu0 0.0
        %444 = vmatprep.subr.mxu0 0.0
        %445 = vmatpush2.xpose.msra.mxu0 0.0
        %446 = vmatprep.subr.mxu0 0.0
        %447 = vmatpush2.xpose.msra.mxu0 0.0
        %448 = vmatprep.subr.mxu0 0.0
        %449 = vmatpush2.xpose.msra.mxu0 0.0
        %450 = vmatprep.subr.mxu0 0.0
        %451 = vmatpush2.xpose.msra.mxu0 0.0
        %452 = vmatprep.subr.mxu0 0.0
        %453 = vmatpush2.xpose.msra.mxu0 0.0
        %454 = vmatprep.subr.mxu0 0.0
        %455 = vmatpush2.xpose.msra.mxu0 0.0
        %456 = vmatprep.subr.mxu0 0.0
        %457 = vmatpush2.xpose.msra.mxu0 0.0
        %458 = vmatprep.subr.mxu0 0.0
        %459 = vmatpush2.xpose.msra.mxu0 0.0
        %460 = vmatprep.mubr.f32.mxu0 0.0
        %461 = vmatmul.mubr.f32.gmra.mxu0 %v391
        %v462 = vpop.f32.mrf.mxu0
        %v463 = vadd.f32 0.0, %v462
        %v464 = vpop.f32.mrf.mxu0
        %465 = vdwg.mxu0
        %v466 = vsub.f32 %v463, %v365
        %vm467 = vcmask 64512
        %468 = vst.msk [vmem:[%s257] sm:$0xff] %vm467, %v466
        %v469 = vsel %vm387, 1e+30, %v358
        %v470 = vsel %vm366, %v469, inf
        %471 = vmin.xlane.f32.xlu0 %v470
        %v472 = vpop.xlane.xlu0 %471
        %vm473 = vcmp.eq.f32.partialorder %v469, %v472
        %v474 = vsel %vm473, %v362, 16
        %v475 = vsel %vm366, %v474, 2147483647
        %v476 = vand.u32 %v475, 65535
        %v477 = vshra.s32 %v475, 16
        %v478 = vcvt.s32.f32 %v476
        %v479 = vcvt.s32.f32 %v477
        %480 = vmin.xlane.f32.xlu0 %v479
        %v481 = vpop.xlane.xlu0 %480
        %vm482 = vcmp.eq.f32.partialorder %v479, %v481
        %v483 = vsel %vm482, %v478, inf
        %484 = vmin.xlane.f32.xlu0 %v483
        %v485 = vpop.xlane.xlu0 %484
        %v486 = vcvt.f32.s32 %v485
        %v487 = vcvt.f32.s32 %v481
        %v488 = vshll.u32 %v487, 16
        %v489 = vadd.s32 %v488, %v486
        %vm490 = vcmp.eq.s32.totalorder %v474, %v489
        %v491 = vsel %vm490, 1, 0
        %v492 = vcvt.s32.f32 %v491
        %v494 = vsel %vm366, %v492, 0
        %496 = vmatprep.subr.mxu0 0.0
        %497 = vmatpush1.xpose.msra.mxu0 0.0
        %498 = vmatprep.subr.mxu0 0.0
        %499 = vmatpush1.xpose.msra.mxu0 0.0
        %500 = vmatprep.subr.mxu0 0.0
        %501 = vmatpush1.xpose.msra.mxu0 0.0
        %502 = vmatprep.subr.mxu0 0.0
        %503 = vmatpush1.xpose.msra.mxu0 0.0
        %504 = vmatprep.subr.mxu0 0.0
        %505 = vmatpush1.xpose.msra.mxu0 0.0
        %506 = vmatprep.subr.mxu0 0.0
        %507 = vmatpush1.xpose.msra.mxu0 0.0
        %508 = vmatprep.subr.mxu0 0.0
        %509 = vmatpush1.xpose.msra.mxu0 0.0
        %510 = vmatprep.subr.mxu0 0.0
        %511 = vmatpush1.xpose.msra.mxu0 0.0
        %512 = vmatprep.subr.mxu0 0.0
        %513 = vmatpush1.xpose.msra.mxu0 0.0
        %514 = vmatprep.subr.mxu0 0.0
        %515 = vmatpush1.xpose.msra.mxu0 0.0
        %516 = vmatprep.subr.mxu0 0.0
        %517 = vmatpush1.xpose.msra.mxu0 0.0
        %518 = vmatprep.subr.mxu0 0.0
        %519 = vmatpush1.xpose.msra.mxu0 0.0
        %520 = vmatprep.subr.mxu0 0.0
        %521 = vmatpush1.xpose.msra.mxu0 0.0
        %522 = vmatprep.subr.mxu0 0.0
        %523 = vmatpush1.xpose.msra.mxu0 0.0
        %524 = vmatprep.subr.mxu0 0.0
        %525 = vmatpush1.xpose.msra.mxu0 0.0
        %526 = vmatprep.subr.mxu0 0.0
        %527 = vmatpush1.xpose.msra.mxu0 %v494
        %528 = vmatprep.subr.mxu0 0.0
        %529 = vmatpush2.xpose.msra.mxu0 0.0
        %530 = vmatprep.subr.mxu0 0.0
        %531 = vmatpush2.xpose.msra.mxu0 0.0
        %532 = vmatprep.subr.mxu0 0.0
        %533 = vmatpush2.xpose.msra.mxu0 0.0
        %534 = vmatprep.subr.mxu0 0.0
        %535 = vmatpush2.xpose.msra.mxu0 0.0
        %536 = vmatprep.subr.mxu0 0.0
        %537 = vmatpush2.xpose.msra.mxu0 0.0
        %538 = vmatprep.subr.mxu0 0.0
        %539 = vmatpush2.xpose.msra.mxu0 0.0
        %540 = vmatprep.subr.mxu0 0.0
        %541 = vmatpush2.xpose.msra.mxu0 0.0
        %542 = vmatprep.subr.mxu0 0.0
        %543 = vmatpush2.xpose.msra.mxu0 0.0
        %544 = vmatprep.subr.mxu0 0.0
        %545 = vmatpush2.xpose.msra.mxu0 0.0
        %546 = vmatprep.subr.mxu0 0.0
        %547 = vmatpush2.xpose.msra.mxu0 0.0
        %548 = vmatprep.subr.mxu0 0.0
        %549 = vmatpush2.xpose.msra.mxu0 0.0
        %550 = vmatprep.subr.mxu0 0.0
        %551 = vmatpush2.xpose.msra.mxu0 0.0
        %552 = vmatprep.subr.mxu0 0.0
        %553 = vmatpush2.xpose.msra.mxu0 0.0
        %554 = vmatprep.subr.mxu0 0.0
        %555 = vmatpush2.xpose.msra.mxu0 0.0
        %556 = vmatprep.subr.mxu0 0.0
        %557 = vmatpush2.xpose.msra.mxu0 0.0
        %558 = vmatprep.subr.mxu0 0.0
        %559 = vmatpush2.xpose.msra.mxu0 0.0
        %560 = vmatprep.mubr.f32.mxu0 0.0
        %561 = vmatmul.mubr.f32.gmra.mxu0 %v391
        %v562 = vpop.f32.mrf.mxu0
        %v563 = vadd.f32 0.0, %v562
        %v564 = vpop.f32.mrf.mxu0
        %565 = vdwg.mxu0
        %v566 = vsub.f32 %v563, %v365
        %s567 = scalar_lea.vmem %s257, 8 [#allocation2]
        %568 = vst.msk [vmem:[%s567] sm:$0xff] %vm467, %v566
        %v569 = vsel %vm490, 1e+30, %v469
        %v570 = vsel %vm366, %v569, inf
        %571 = vmin.xlane.f32.xlu0 %v570
        %v572 = vpop.xlane.xlu0 %571
        %vm573 = vcmp.eq.f32.partialorder %v569, %v572
        %v574 = vsel %vm573, %v362, 16
        %v575 = vsel %vm366, %v574, 2147483647
        %v576 = vand.u32 %v575, 65535
        %v577 = vshra.s32 %v575, 16
        %v578 = vcvt.s32.f32 %v576
        %v579 = vcvt.s32.f32 %v577
        %580 = vmin.xlane.f32.xlu0 %v579
        %v581 = vpop.xlane.xlu0 %580
        %vm582 = vcmp.eq.f32.partialorder %v579, %v581
        %v583 = vsel %vm582, %v578, inf
        %584 = vmin.xlane.f32.xlu0 %v583
        %v585 = vpop.xlane.xlu0 %584
        %v586 = vcvt.f32.s32 %v585
        %v587 = vcvt.f32.s32 %v581
        %v588 = vshll.u32 %v587, 16
        %v589 = vadd.s32 %v588, %v586
        %vm590 = vcmp.eq.s32.totalorder %v574, %v589
        %v591 = vsel %vm590, 1, 0
        %v592 = vcvt.s32.f32 %v591
        %v594 = vsel %vm366, %v592, 0
        %596 = vmatprep.subr.mxu0 0.0
        %597 = vmatpush1.xpose.msra.mxu0 0.0
        %598 = vmatprep.subr.mxu0 0.0
        %599 = vmatpush1.xpose.msra.mxu0 0.0
        %600 = vmatprep.subr.mxu0 0.0
        %601 = vmatpush1.xpose.msra.mxu0 0.0
        %602 = vmatprep.subr.mxu0 0.0
        %603 = vmatpush1.xpose.msra.mxu0 0.0
        %604 = vmatprep.subr.mxu0 0.0
        %605 = vmatpush1.xpose.msra.mxu0 0.0
        %606 = vmatprep.subr.mxu0 0.0
        %607 = vmatpush1.xpose.msra.mxu0 0.0
        %608 = vmatprep.subr.mxu0 0.0
        %609 = vmatpush1.xpose.msra.mxu0 0.0
        %610 = vmatprep.subr.mxu0 0.0
        %611 = vmatpush1.xpose.msra.mxu0 0.0
        %612 = vmatprep.subr.mxu0 0.0
        %613 = vmatpush1.xpose.msra.mxu0 0.0
        %614 = vmatprep.subr.mxu0 0.0
        %615 = vmatpush1.xpose.msra.mxu0 0.0
        %616 = vmatprep.subr.mxu0 0.0
        %617 = vmatpush1.xpose.msra.mxu0 0.0
        %618 = vmatprep.subr.mxu0 0.0
        %619 = vmatpush1.xpose.msra.mxu0 0.0
        %620 = vmatprep.subr.mxu0 0.0
        %621 = vmatpush1.xpose.msra.mxu0 0.0
        %622 = vmatprep.subr.mxu0 0.0
        %623 = vmatpush1.xpose.msra.mxu0 0.0
        %624 = vmatprep.subr.mxu0 0.0
        %625 = vmatpush1.xpose.msra.mxu0 0.0
        %626 = vmatprep.subr.mxu0 0.0
        %627 = vmatpush1.xpose.msra.mxu0 %v594
        %628 = vmatprep.subr.mxu0 0.0
        %629 = vmatpush2.xpose.msra.mxu0 0.0
        %630 = vmatprep.subr.mxu0 0.0
        %631 = vmatpush2.xpose.msra.mxu0 0.0
        %632 = vmatprep.subr.mxu0 0.0
        %633 = vmatpush2.xpose.msra.mxu0 0.0
        %634 = vmatprep.subr.mxu0 0.0
        %635 = vmatpush2.xpose.msra.mxu0 0.0
        %636 = vmatprep.subr.mxu0 0.0
        %637 = vmatpush2.xpose.msra.mxu0 0.0
        %638 = vmatprep.subr.mxu0 0.0
        %639 = vmatpush2.xpose.msra.mxu0 0.0
        %640 = vmatprep.subr.mxu0 0.0
        %641 = vmatpush2.xpose.msra.mxu0 0.0
        %642 = vmatprep.subr.mxu0 0.0
        %643 = vmatpush2.xpose.msra.mxu0 0.0
        %644 = vmatprep.subr.mxu0 0.0
        %645 = vmatpush2.xpose.msra.mxu0 0.0
        %646 = vmatprep.subr.mxu0 0.0
        %647 = vmatpush2.xpose.msra.mxu0 0.0
        %648 = vmatprep.subr.mxu0 0.0
        %649 = vmatpush2.xpose.msra.mxu0 0.0
        %650 = vmatprep.subr.mxu0 0.0
        %651 = vmatpush2.xpose.msra.mxu0 0.0
        %652 = vmatprep.subr.mxu0 0.0
        %653 = vmatpush2.xpose.msra.mxu0 0.0
        %654 = vmatprep.subr.mxu0 0.0
        %655 = vmatpush2.xpose.msra.mxu0 0.0
        %656 = vmatprep.subr.mxu0 0.0
        %657 = vmatpush2.xpose.msra.mxu0 0.0
        %658 = vmatprep.subr.mxu0 0.0
        %659 = vmatpush2.xpose.msra.mxu0 0.0
        %660 = vmatprep.mubr.f32.mxu0 0.0
        %661 = vmatmul.mubr.f32.gmra.mxu0 %v391
        %v662 = vpop.f32.mrf.mxu0
        %v663 = vadd.f32 0.0, %v662
        %v664 = vpop.f32.mrf.mxu0
        %665 = vdwg.mxu0
        %v666 = vsub.f32 %v663, %v365
        %s667 = scalar_lea.vmem %s257, 16 [#allocation2]
        %668 = vst.msk [vmem:[%s667] sm:$0xff] %vm467, %v666
        %v669 = vsel %vm590, 1e+30, %v569
        %v670 = vsel %vm366, %v669, inf
        %671 = vmin.xlane.f32.xlu0 %v670
        %v672 = vpop.xlane.xlu0 %671
        %vm673 = vcmp.eq.f32.partialorder %v669, %v672
        %v674 = vsel %vm673, %v362, 16
        %v675 = vsel %vm366, %v674, 2147483647
        %v676 = vand.u32 %v675, 65535
        %v677 = vshra.s32 %v675, 16
        %v678 = vcvt.s32.f32 %v676
        %v679 = vcvt.s32.f32 %v677
        %680 = vmin.xlane.f32.xlu0 %v679
        %v681 = vpop.xlane.xlu0 %680
        %vm682 = vcmp.eq.f32.partialorder %v679, %v681
        %v683 = vsel %vm682, %v678, inf
        %684 = vmin.xlane.f32.xlu0 %v683
        %v685 = vpop.xlane.xlu0 %684
        %v686 = vcvt.f32.s32 %v685
        %v687 = vcvt.f32.s32 %v681
        %v688 = vshll.u32 %v687, 16
        %v689 = vadd.s32 %v688, %v686
        %vm690 = vcmp.eq.s32.totalorder %v674, %v689
        %v691 = vsel %vm690, 1, 0
        %v692 = vcvt.s32.f32 %v691
        %v694 = vsel %vm366, %v692, 0
        %696 = vmatprep.subr.mxu0 0.0
        %697 = vmatpush1.xpose.msra.mxu0 0.0
        %698 = vmatprep.subr.mxu0 0.0
        %699 = vmatpush1.xpose.msra.mxu0 0.0
        %700 = vmatprep.subr.mxu0 0.0
        %701 = vmatpush1.xpose.msra.mxu0 0.0
        %702 = vmatprep.subr.mxu0 0.0
        %703 = vmatpush1.xpose.msra.mxu0 0.0
        %704 = vmatprep.subr.mxu0 0.0
        %705 = vmatpush1.xpose.msra.mxu0 0.0
        %706 = vmatprep.subr.mxu0 0.0
        %707 = vmatpush1.xpose.msra.mxu0 0.0
        %708 = vmatprep.subr.mxu0 0.0
        %709 = vmatpush1.xpose.msra.mxu0 0.0
        %710 = vmatprep.subr.mxu0 0.0
        %711 = vmatpush1.xpose.msra.mxu0 0.0
        %712 = vmatprep.subr.mxu0 0.0
        %713 = vmatpush1.xpose.msra.mxu0 0.0
        %714 = vmatprep.subr.mxu0 0.0
        %715 = vmatpush1.xpose.msra.mxu0 0.0
        %716 = vmatprep.subr.mxu0 0.0
        %717 = vmatpush1.xpose.msra.mxu0 0.0
        %718 = vmatprep.subr.mxu0 0.0
        %719 = vmatpush1.xpose.msra.mxu0 0.0
        %720 = vmatprep.subr.mxu0 0.0
        %721 = vmatpush1.xpose.msra.mxu0 0.0
        %722 = vmatprep.subr.mxu0 0.0
        %723 = vmatpush1.xpose.msra.mxu0 0.0
        %724 = vmatprep.subr.mxu0 0.0
        %725 = vmatpush1.xpose.msra.mxu0 0.0
        %726 = vmatprep.subr.mxu0 0.0
        %727 = vmatpush1.xpose.msra.mxu0 %v694
        %728 = vmatprep.subr.mxu0 0.0
        %729 = vmatpush2.xpose.msra.mxu0 0.0
        %730 = vmatprep.subr.mxu0 0.0
        %731 = vmatpush2.xpose.msra.mxu0 0.0
        %732 = vmatprep.subr.mxu0 0.0
        %733 = vmatpush2.xpose.msra.mxu0 0.0
        %734 = vmatprep.subr.mxu0 0.0
        %735 = vmatpush2.xpose.msra.mxu0 0.0
        %736 = vmatprep.subr.mxu0 0.0
        %737 = vmatpush2.xpose.msra.mxu0 0.0
        %738 = vmatprep.subr.mxu0 0.0
        %739 = vmatpush2.xpose.msra.mxu0 0.0
        %740 = vmatprep.subr.mxu0 0.0
        %741 = vmatpush2.xpose.msra.mxu0 0.0
        %742 = vmatprep.subr.mxu0 0.0
        %743 = vmatpush2.xpose.msra.mxu0 0.0
        %744 = vmatprep.subr.mxu0 0.0
        %745 = vmatpush2.xpose.msra.mxu0 0.0
        %746 = vmatprep.subr.mxu0 0.0
        %747 = vmatpush2.xpose.msra.mxu0 0.0
        %748 = vmatprep.subr.mxu0 0.0
        %749 = vmatpush2.xpose.msra.mxu0 0.0
        %750 = vmatprep.subr.mxu0 0.0
        %751 = vmatpush2.xpose.msra.mxu0 0.0
        %752 = vmatprep.subr.mxu0 0.0
        %753 = vmatpush2.xpose.msra.mxu0 0.0
        %754 = vmatprep.subr.mxu0 0.0
        %755 = vmatpush2.xpose.msra.mxu0 0.0
        %756 = vmatprep.subr.mxu0 0.0
        %757 = vmatpush2.xpose.msra.mxu0 0.0
        %758 = vmatprep.subr.mxu0 0.0
        %759 = vmatpush2.xpose.msra.mxu0 0.0
        %760 = vmatprep.mubr.f32.mxu0 0.0
        %761 = vmatmul.mubr.f32.gmra.mxu0 %v391
        %v762 = vpop.f32.mrf.mxu0
        %v763 = vadd.f32 0.0, %v762
        %v764 = vpop.f32.mrf.mxu0
        %765 = vdwg.mxu0
        %v766 = vsub.f32 %v763, %v365
        %s767 = scalar_lea.vmem %s257, 24 [#allocation2]
        %768 = vst.msk [vmem:[%s767] sm:$0xff] %vm467, %v766
        %s769 = sand.u32 %s148, 1
        %s770 = scalar_lea.sflag [#allocation3], %s769
        %s771 = sand.u32 %s148, 1
        %s772 = smul.addr %s771, 32
        %s773 = scalar_lea.vmem [#allocation2], %s772
        // Predicated region
        $region37: #{tpu_custom_call.1} parent=35 // pred_check
          %p774 = pneg %p158
        $region38: #{tpu_custom_call.1} parent=35 // pred_check_branch
          %776 = sbr.rel (%p774) target = $region40
        $region39: #{tpu_custom_call.1} parent=35 // pred_region
          %s778 = ssub.s32 512, 512
          %779 = vsyncadd %s770, %s778
          %s780 = smul.addr %s22, 4
          %s781 = sadd.s32 %s23, %s780
          %s782 = smul.addr %s781, 128
          %s783 = scalar_lea.hbm %s4, %s782
          %s784 = sshll.u32 %s773, 4
          %s785 = int_to_ptr.vmem [resolvable:$true] %s784
          %790 = dma.vmem_to_hbm [thread:$0]  %s785, 512, %s783, %s770, 128, 128, 8
        $region40: #{tpu_custom_call.1} parent=35 // pred_fallthru
          _
      $region36: #{tpu_custom_call.1} parent=5 // pred_fallthru
        _
      %p791 = scmp.le.s32.totalorder 2, %s13
      // Predicated region
      $region41: #{tpu_custom_call.1} parent=5 // pred_check
        %p792 = pneg %p791
      $region42: #{tpu_custom_call.1} parent=5 // pred_check_branch
        %794 = sbr.rel (%p792) target = $region44
      $region43: #{tpu_custom_call.1} parent=5 // pred_region
        %s795 = ssub.s32 %s13, 2
        // Predicated region
        $region45: #{tpu_custom_call.1} parent=43 // pred_check
          %p796 = pneg %p164
        $region46: #{tpu_custom_call.1} parent=43 // pred_check_branch
          %798 = sbr.rel (%p796) target = $region48
        $region47: #{tpu_custom_call.1} parent=43 // pred_region
          %s799 = sand.u32 %s149, 1
          %s800 = scalar_lea.sflag [#allocation3], %s799
          %s801 = sand.u32 %s149, 1
          %s802 = smul.addr %s801, 32
          %s803 = scalar_lea.vmem [#allocation2], %s802
          %804 = dma.done %s800, 512
        $region48: #{tpu_custom_call.1} parent=43 // pred_fallthru
          _
      $region44: #{tpu_custom_call.1} parent=5 // pred_fallthru
        _
    $region6: #{tpu_custom_call.1} parent=1 // loop_footer
      %s17 = sadd.s32 1, %s13
    $region7: #{tpu_custom_call.1} parent=1 // loop_footer_branch
      %12 = sbr.rel target = $region3
    $region8: #{tpu_custom_call.1} parent=1 // loop_exit
      _
    %805 = vsyncpa [#allocation3], 1
    %s806 = scalar_lea.sflag [#allocation3], 1
    %807 = vsyncpa %s806, 1

</llo_original>
